<compile_context>
chip_gen: v7x
topology: tpu7x:2x2x1
jax: 0.10.0
libtpu: 0.0.40
codegen_flags: <defaults>
</compile_context>

<pallas_src>
import functools

import jax
import jax.numpy as jnp
from jax import lax
from jax.experimental import pallas as pl
from jax.experimental.pallas import tpu as pltpu

_EPS = 1e-5            # nn.LayerNorm default eps
_SQRT_HALF = 0.7071067811865476
_LANE = 128
_SUBLANE = 8


def _round_up(v, m):
    return (v + m - 1) // m * m


def _erf(z):
    # Abramowitz & Stegun 7.1.26 polynomial (max abs err ~1.5e-7); exp -> EUP.
    # TODO(synk): switch to lax.erf once Mosaic erf lowering is confirmed on all
    # target TPU generations; polynomial kept to guarantee lowering.
    a1, a2, a3, a4, a5 = 0.254829592, -0.284496736, 1.421413741, -1.453152027, 1.061405429
    p = 0.3275911
    s = jnp.where(z >= 0.0, 1.0, -1.0)
    az = jnp.abs(z)
    t = 1.0 / (1.0 + p * az)
    poly = ((((a5 * t + a4) * t + a3) * t + a2) * t + a1) * t
    return s * (1.0 - poly * jnp.exp(-az * az))


def _gelu(x):
    # exact (erf-based) GELU, matching torch.nn.GELU default
    return 0.5 * x * (1.0 + _erf(x * _SQRT_HALF))


def _layernorm_masked(v, gamma, beta, true_dim):
    # v is zero in the padded columns and gamma/beta are zero-padded, so the
    # sums only see real channels; divide by the *true* feature count.
    inv_n = 1.0 / float(true_dim)
    mu = jnp.sum(v, axis=-1, keepdims=True) * inv_n
    var = jnp.sum(v * v, axis=-1, keepdims=True) * inv_n - mu * mu
    return (v - mu) * lax.rsqrt(var + _EPS) * gamma + beta


# ----------------------------------------------------------------------------
# fused kernel: one grid step == one CrossTransformer layer on one batch tile
# ----------------------------------------------------------------------------
def _fused_kernel(x_ref, comp_ref, shead_ref, wA_ref, wB_ref, vec_ref, out_ref,
                  *, c_dim, CP, XP, HP):
    f32 = jnp.float32
    d = pl.program_id(1)

    # out block is resident across the depth axis -> it carries the running x.
    @pl.when(d == 0)
    def _():
        out_ref[...] = x_ref[...]

    x_in = out_ref[...].astype(f32)          # (TB, XP) current layer input
    comp = comp_ref[...].astype(f32)         # (TB, CP)

    # ---- unpack packed 1-row vectors (biases / LayerNorm affine) ----
    b_pi = vec_ref[0:1, :CP]
    g1x  = vec_ref[1:2, :CP]
    b1x  = vec_ref[2:3, :CP]
    g1c  = vec_ref[3:4, :CP]
    b1c  = vec_ref[4:5, :CP]
    bp   = vec_ref[5:6, :CP]
    g2   = vec_ref[6:7, :CP]
    b2   = vec_ref[7:8, :CP]
    bb1  = vec_ref[8:9, :HP]
    bb2  = vec_ref[9:10, :CP]
    b_po = vec_ref[10:11, :XP]

    # ---- LinearProject.project_in : Linear(x_dim -> c_dim) ----
    h = jnp.dot(x_in, wB_ref[0:XP, :], preferred_element_type=f32) + b_pi

    # ---- CrossTransformerEncoderLayer pre-norms ----
    xn = _layernorm_masked(h, g1x, b1x, c_dim)       # x_norm1
    cn = _layernorm_masked(comp, g1c, b1c, c_dim)    # c_norm1

    # ---- MultiHeadCrossAttention over the length-2 key seq [xn ; cn] ----
    # Fused projections (scale pre-folded into wq): xn @ [wq|wk|wv], cn @ [wk|wv]
    qkv_x = jnp.dot(xn, wA_ref[:, 0:3 * CP], preferred_element_type=f32)
    kv_c  = jnp.dot(cn, wA_ref[:, CP:3 * CP], preferred_element_type=f32)
    q  = qkv_x[:, 0:CP]
    kx = qkv_x[:, CP:2 * CP]
    vx = qkv_x[:, 2 * CP:3 * CP]
    kc = kv_c[:, 0:CP]
    vc = kv_c[:, CP:2 * CP]

    # Per-head q.k score, broadcast back to every channel of the head via the
    # resident block-diagonal matrix (lane-dense MXU op, no per-layer mask DMA).
    S = shead_ref[...]                                  # (CP, CP)
    s0 = jnp.dot(q * kx, S, preferred_element_type=f32)  # key 0 = xn
    s1 = jnp.dot(q * kc, S, preferred_element_type=f32)  # key 1 = cn

    # softmax over the 2 key positions (per head, replicated per channel)
    m = jnp.maximum(s0, s1)
    e0 = jnp.exp(s0 - m)
    e1 = jnp.exp(s1 - m)
    inv = pl.reciprocal(e0 + e1, approx=True)             # EUP slot
    av = (e0 * inv) * vx + (e1 * inv) * vc                 # attn @ v
    av = av + xn                                           # + x_copy
    attn_out = jnp.dot(av, wA_ref[:, 3 * CP:4 * CP],
                       preferred_element_type=f32) + bp    # proj
    x1 = xn + attn_out                                     # residual 1

    # ---- MLP branch ----
    xn2 = _layernorm_masked(x1, g2, b2, c_dim)             # x_norm2
    hid = jnp.dot(xn2, wA_ref[:, 4 * CP:4 * CP + HP],
                  preferred_element_type=f32) + bb1
    hid = _gelu(hid)
    mlp = jnp.dot(hid, wB_ref[XP:XP + HP, :], preferred_element_type=f32) + bb2
    x2 = x1 + mlp                                          # residual 2

    # ---- LinearProject.project_out + outer residual (CrossTransformer_meta) ----
    yo = jnp.dot(x2, wA_ref[:, 4 * CP + HP:4 * CP + HP + XP],
                 preferred_element_type=f32) + b_po
    out_ref[...] = (x_in + yo).astype(out_ref.dtype)


# ----------------------------------------------------------------------------
# host-side packing of per-layer parameters into depth-stacked padded slabs
# ----------------------------------------------------------------------------
def pack_params(layers, x_dim, c_dim, hidden, num_heads):
    assert c_dim % num_heads == 0
    CP = _round_up(c_dim, _LANE)
    XP = _round_up(x_dim, _LANE)
    HP = _round_up(hidden, _LANE)
    VP = max(CP, XP, HP)
    head_dim = c_dim // num_heads
    scale = float(head_dim ** -0.5)

    def pad2(w, r, c):
        return jnp.pad(w, ((0, r - w.shape[0]), (0, c - w.shape[1])))

    wA_list, wB_list, vec_list = [], [], []
    for lp in layers:
        wA = jnp.concatenate([
            pad2(lp["wq"] * scale, CP, CP),   # attention scale folded into q proj
            pad2(lp["wk"], CP, CP),
            pad2(lp["wv"], CP, CP),
            pad2(lp["wp"], CP, CP),
            pad2(lp["w1"], CP, HP),
            pad2(lp["w_po"], CP, XP),
        ], axis=1)                            # (CP, 4*CP + HP + XP)
        wB = jnp.concatenate([
            pad2(lp["w_pi"], XP, CP),
            pad2(lp["w2"], HP, CP),
        ], axis=0)                            # (XP + HP, CP)
        rows = [
            pad2(lp["b_pi"], 1, VP), pad2(lp["g1x"], 1, VP), pad2(lp["b1x"], 1, VP),
            pad2(lp["g1c"], 1, VP), pad2(lp["b1c"], 1, VP), pad2(lp["bp"], 1, VP),
            pad2(lp["g2"], 1, VP), pad2(lp["b2"], 1, VP), pad2(lp["bb1"], 1, VP),
            pad2(lp["bb2"], 1, VP), pad2(lp["b_po"], 1, VP),
        ]
        vec = jnp.concatenate(
            rows + [jnp.zeros((16 - len(rows), VP), jnp.float32)], axis=0)  # (16, VP)
        wA_list.append(wA)
        wB_list.append(wB)
        vec_list.append(vec)

    # block-diagonal "same head" matrix, shared by all layers (resident in VMEM).
    ch = jnp.arange(CP) // head_dim           # padded channels get head ids >= H
    same_head = (ch[:, None] == ch[None, :]).astype(jnp.float32)   # (CP, CP)

    return dict(
        wA=jnp.stack(wA_list), wB=jnp.stack(wB_list), vec=jnp.stack(vec_list),
        same_head=same_head,
        CP=CP, XP=XP, HP=HP, VP=VP, depth=len(layers),
        c_dim=c_dim, x_dim=x_dim, hidden=hidden,
    )


# ----------------------------------------------------------------------------
# wrapper: pad, launch the single fused pallas_call, unpad
# ----------------------------------------------------------------------------
def cross_transformer_meta(x, y, complement, packed):
    B, x_dim = x.shape
    c_dim = packed["c_dim"]
    CP, XP, HP, VP = packed["CP"], packed["XP"], packed["HP"], packed["VP"]
    depth = packed["depth"]

    comp = jnp.concatenate([y, complement], axis=-1)     # == torch.cat([y, complement], 1)
    assert comp.shape[-1] == c_dim

    TB = _SUBLANE if B <= _SUBLANE else _LANE
    B_pad = _round_up(B, TB)
    x_p = jnp.pad(x.astype(jnp.float32), ((0, B_pad - B), (0, XP - x_dim)))
    c_p = jnp.pad(comp.astype(jnp.float32), ((0, B_pad - B), (0, CP - c_dim)))

    WA = 4 * CP + HP + XP
    KB = XP + HP
    RV = packed["vec"].shape[1]
    grid = (B_pad // TB, depth)

    # VMEM budget (double-buffered blocks) -> explicit limit, capped below v7x's
    # 64 MiB physical VMEM.
    block_bytes = 4 * (2 * TB * XP + TB * CP + CP * CP + CP * WA + KB * CP + RV * VP)
    vmem_limit = int(min(max(2 * block_bytes + (4 << 20), 32 << 20), 56 << 20))

    flops = 2 * B_pad * depth * (XP * CP + 3 * CP * CP + 2 * CP * CP
                                 + 2 * CP * CP + CP * CP + 2 * CP * HP + CP * XP)
    transcendentals = B_pad * depth * (3 * CP + HP)
    bytes_accessed = int(4 * (2 * x_p.size + c_p.size + packed["same_head"].size
                              + packed["wA"].size + packed["wB"].size
                              + packed["vec"].size))

    kernel = functools.partial(_fused_kernel, c_dim=c_dim, CP=CP, XP=XP, HP=HP)

    out = pl.pallas_call(
        kernel,
        out_shape=jax.ShapeDtypeStruct((B_pad, XP), jnp.float32),
        grid=grid,
        in_specs=[
            pl.BlockSpec((TB, XP), lambda b, d: (b, 0)),            # x (layer-0 input)
            pl.BlockSpec((TB, CP), lambda b, d: (b, 0)),            # comp (resident per tile)
            pl.BlockSpec((CP, CP), lambda b, d: (0, 0)),            # same-head matrix (resident)
            pl.BlockSpec((None, CP, WA), lambda b, d: (d, 0, 0)),   # K=CP weight slab
            pl.BlockSpec((None, KB, CP), lambda b, d: (d, 0, 0)),   # project_in | mlp.fc2
            pl.BlockSpec((None, RV, VP), lambda b, d: (d, 0, 0)),   # bias / LN rows
        ],
        out_specs=pl.BlockSpec((TB, XP), lambda b, d: (b, 0)),
        input_output_aliases={0: 0},
        compiler_params=pltpu.CompilerParams(
            dimension_semantics=("parallel", "arbitrary"),
            vmem_limit_bytes=vmem_limit),
        cost_estimate=pl.CostEstimate(
            flops=int(flops), transcendentals=int(transcendentals),
            bytes_accessed=bytes_accessed),
    )(x_p, c_p, packed["same_head"], packed["wA"], packed["wB"], packed["vec"])

    return out[:B, :x_dim]


# ----------------------------------------------------------------------------
# parameter init (PyTorch layout: Linear weight stored as (in, out) here)
# ----------------------------------------------------------------------------
def init_params(key, x_dim, c_dim, num_heads, depth, mlp_ratio=1.0):
    assert c_dim % num_heads == 0
    hidden = int(c_dim * mlp_ratio)

    def nxt():
        nonlocal key
        key, sub = jax.random.split(key)
        return sub

    def W(i, o):
        return jax.random.normal(nxt(), (i, o), jnp.float32) * 0.1

    def b(o):
        return jax.random.normal(nxt(), (1, o), jnp.float32) * 0.1

    def gamma(o):
        return 1.0 + 0.1 * jax.random.normal(nxt(), (1, o), jnp.float32)

    layers = []
    for _ in range(depth):
        layers.append(dict(
            w_pi=W(x_dim, c_dim), b_pi=b(c_dim),
            g1x=gamma(c_dim), b1x=b(c_dim),
            g1c=gamma(c_dim), b1c=b(c_dim),
            wq=W(c_dim, c_dim), wk=W(c_dim, c_dim), wv=W(c_dim, c_dim),
            wp=W(c_dim, c_dim), bp=b(c_dim),
            g2=gamma(c_dim), b2=b(c_dim),
            w1=W(c_dim, hidden), bb1=b(hidden),
            w2=W(hidden, c_dim), bb2=b(c_dim),
            w_po=W(c_dim, x_dim), b_po=b(x_dim),
        ))
    return layers, hidden


# ----------------------------------------------------------------------------
# pure-JAX reference (mirrors the PyTorch forward) for a numerical self-check
# ----------------------------------------------------------------------------
def _ln_ref(v, gamma, beta):
    mu = jnp.mean(v, axis=-1, keepdims=True)
    var = jnp.mean((v - mu) ** 2, axis=-1, keepdims=True)
    return (v - mu) * lax.rsqrt(var + _EPS) * gamma + beta


def _reference_forward(x, y, complement, layers, num_heads):
    HI = jax.lax.Precision.HIGHEST
    comp = jnp.concatenate([y, complement], axis=-1)
    C = comp.shape[-1]
    hd = C // num_heads
    scale = float(hd ** -0.5)
    B = x.shape[0]
    for lp in layers:
        h = jnp.dot(x, lp["w_pi"], precision=HI) + lp["b_pi"]
        xn = _ln_ref(h, lp["g1x"], lp["b1x"])
        cn = _ln_ref(comp, lp["g1c"], lp["b1c"])
        q = jnp.dot(xn, lp["wq"], precision=HI) * scale
        kx = jnp.dot(xn, lp["wk"], precision=HI)
        kc = jnp.dot(cn, lp["wk"], precision=HI)
        vx = jnp.dot(xn, lp["wv"], precision=HI)
        vc = jnp.dot(cn, lp["wv"], precision=HI)
        s0 = jnp.sum((q * kx).reshape(B, num_heads, hd), axis=-1)
        s1 = jnp.sum((q * kc).reshape(B, num_heads, hd), axis=-1)
        m = jnp.maximum(s0, s1)
        e0 = jnp.exp(s0 - m)
        e1 = jnp.exp(s1 - m)
        p0 = jnp.repeat(e0 / (e0 + e1), hd, axis=-1)
        p1 = jnp.repeat(e1 / (e0 + e1), hd, axis=-1)
        av = p0 * vx + p1 * vc + xn
        attn_out = jnp.dot(av, lp["wp"], precision=HI) + lp["bp"]
        x1 = xn + attn_out
        xn2 = _ln_ref(x1, lp["g2"], lp["b2"])
        hid = _gelu(jnp.dot(xn2, lp["w1"], precision=HI) + lp["bb1"])
        mlp = jnp.dot(hid, lp["w2"], precision=HI) + lp["bb2"]
        x2 = x1 + mlp
        x = x + jnp.dot(x2, lp["w_po"], precision=HI) + lp["b_po"]
    return x


if __name__ == "__main__":
    B = 2
    x_dim = 16
    y_dim = 16
    comp_dim = 16
    c_dim = y_dim + comp_dim          # 32: last dim of torch.cat([y, complement], 1)
    num_heads = 4
    depth = 2
    mlp_ratio = 1.0

    key = jax.random.PRNGKey(0)
    kx, ky, kc, kp = jax.random.split(key, 4)
    x = jax.random.normal(kx, (B, x_dim), jnp.float32)
    y = jax.random.normal(ky, (B, y_dim), jnp.float32)
    complement = jax.random.normal(kc, (B, comp_dim), jnp.float32)

    layers, hidden = init_params(kp, x_dim, c_dim, num_heads, depth, mlp_ratio)
    packed = pack_params(layers, x_dim, c_dim, hidden, num_heads)

    out = cross_transformer_meta(x, y, complement, packed)
    out = jax.block_until_ready(out)

    assert out.shape == (B, x_dim) and out.dtype == jnp.float32
    assert bool(jnp.all(jnp.isfinite(out)))

    ref = _reference_forward(x, y, complement, layers, num_heads)
    err = float(jnp.max(jnp.abs(out - ref)))
    assert err < 1e-2, f"mismatch vs reference: {err}"

    print("KERNEL_OK")
</pallas_src>

<mosaic_0001>
module attributes {stable_mosaic.version = 11 : i64} {
  func.func @_fused_kernel(%arg0: i32, %arg1: i32, %arg2: memref<8x128xf32, #tpu.memory_space<vmem>>, %arg3: memref<8x128xf32, #tpu.memory_space<vmem>>, %arg4: memref<128x128xf32, #tpu.memory_space<vmem>>, %arg5: memref<1x128x768xf32, #tpu.memory_space<vmem>>, %arg6: memref<1x256x128xf32, #tpu.memory_space<vmem>>, %arg7: memref<1x16x128xf32, #tpu.memory_space<vmem>>, %arg8: memref<8x128xf32, #tpu.memory_space<vmem>>) attributes {dimension_semantics = [#tpu.dimension_semantics<parallel>, #tpu.dimension_semantics<arbitrary>], iteration_bounds = array<i64: 1, 2>, scalar_prefetch = 0 : i64, scratch_operands = 0 : i64, tpu.core_type = #tpu.core_type<tc>, window_params = [{transform_indices = @transform_0, window_bounds = array<i64: 8, 128>}, {transform_indices = @transform_1, window_bounds = array<i64: 8, 128>}, {pipeline_mode = #tpu.pipeline_mode<synchronous>, transform_indices = @transform_2, window_bounds = array<i64: 128, 128>}, {transform_indices = @transform_3, window_bounds = array<i64: 1, 128, 768>}, {transform_indices = @transform_4, window_bounds = array<i64: 1, 256, 128>}, {transform_indices = @transform_5, window_bounds = array<i64: 1, 16, 128>}, {transform_indices = @transform_6, window_bounds = array<i64: 8, 128>}]} {
    %c0_i32 = arith.constant 0 : i32
    %0 = arith.cmpi eq, %arg1, %c0_i32 : i32
    %1 = arith.extui %0 : i1 to i32
    %c0_i32_0 = arith.constant 0 : i32
    %2 = arith.cmpi ne, %1, %c0_i32_0 : i32
    scf.if %2 {
      %c0_87 = arith.constant 0 : index
      %c0_88 = arith.constant 0 : index
      %192 = vector.load %arg2[%c0_87, %c0_88] : memref<8x128xf32, #tpu.memory_space<vmem>>, vector<8x128xf32>
      %c0_89 = arith.constant 0 : index
      %c0_90 = arith.constant 0 : index
      %193 = vector.load %arg8[%c0_89, %c0_90] : memref<8x128xf32, #tpu.memory_space<vmem>>, vector<8x128xf32>
      tpu.vector_store %arg8[%c0_89, %c0_90], %192 {strides = array<i32>} : memref<8x128xf32, #tpu.memory_space<vmem>>, vector<8x128xf32>,
    } else {
    }
    %c0 = arith.constant 0 : index
    %c0_1 = arith.constant 0 : index
    %3 = vector.load %arg8[%c0, %c0_1] : memref<8x128xf32, #tpu.memory_space<vmem>>, vector<8x128xf32>
    %c0_2 = arith.constant 0 : index
    %c0_3 = arith.constant 0 : index
    %4 = vector.load %arg3[%c0_2, %c0_3] : memref<8x128xf32, #tpu.memory_space<vmem>>, vector<8x128xf32>
    %c0_4 = arith.constant 0 : index
    %c0_5 = arith.constant 0 : index
    %c0_6 = arith.constant 0 : index
    %5 = vector.load %arg7[%c0_4, %c0_5, %c0_6] : memref<1x16x128xf32, #tpu.memory_space<vmem>>, vector<1x1x128xf32>
    %6 = vector.shape_cast %5 : vector<1x1x128xf32> to vector<1x128xf32>
    %c0_7 = arith.constant 0 : index
    %c1 = arith.constant 1 : index
    %c0_8 = arith.constant 0 : index
    %7 = vector.load %arg7[%c0_7, %c1, %c0_8] : memref<1x16x128xf32, #tpu.memory_space<vmem>>, vector<1x1x128xf32>
    %8 = vector.shape_cast %7 : vector<1x1x128xf32> to vector<1x128xf32>
    %c0_9 = arith.constant 0 : index
    %c2 = arith.constant 2 : index
    %c0_10 = arith.constant 0 : index
    %9 = vector.load %arg7[%c0_9, %c2, %c0_10] : memref<1x16x128xf32, #tpu.memory_space<vmem>>, vector<1x1x128xf32>
    %10 = vector.shape_cast %9 : vector<1x1x128xf32> to vector<1x128xf32>
    %c0_11 = arith.constant 0 : index
    %c3 = arith.constant 3 : index
    %c0_12 = arith.constant 0 : index
    %11 = vector.load %arg7[%c0_11, %c3, %c0_12] : memref<1x16x128xf32, #tpu.memory_space<vmem>>, vector<1x1x128xf32>
    %12 = vector.shape_cast %11 : vector<1x1x128xf32> to vector<1x128xf32>
    %c0_13 = arith.constant 0 : index
    %c4 = arith.constant 4 : index
    %c0_14 = arith.constant 0 : index
    %13 = vector.load %arg7[%c0_13, %c4, %c0_14] : memref<1x16x128xf32, #tpu.memory_space<vmem>>, vector<1x1x128xf32>
    %14 = vector.shape_cast %13 : vector<1x1x128xf32> to vector<1x128xf32>
    %c0_15 = arith.constant 0 : index
    %c5 = arith.constant 5 : index
    %c0_16 = arith.constant 0 : index
    %15 = vector.load %arg7[%c0_15, %c5, %c0_16] : memref<1x16x128xf32, #tpu.memory_space<vmem>>, vector<1x1x128xf32>
    %16 = vector.shape_cast %15 : vector<1x1x128xf32> to vector<1x128xf32>
    %c0_17 = arith.constant 0 : index
    %c6 = arith.constant 6 : index
    %c0_18 = arith.constant 0 : index
    %17 = vector.load %arg7[%c0_17, %c6, %c0_18] : memref<1x16x128xf32, #tpu.memory_space<vmem>>, vector<1x1x128xf32>
    %18 = vector.shape_cast %17 : vector<1x1x128xf32> to vector<1x128xf32>
    %c0_19 = arith.constant 0 : index
    %c7 = arith.constant 7 : index
    %c0_20 = arith.constant 0 : index
    %19 = vector.load %arg7[%c0_19, %c7, %c0_20] : memref<1x16x128xf32, #tpu.memory_space<vmem>>, vector<1x1x128xf32>
    %20 = vector.shape_cast %19 : vector<1x1x128xf32> to vector<1x128xf32>
    %c0_21 = arith.constant 0 : index
    %c8 = arith.constant 8 : index
    %c0_22 = arith.constant 0 : index
    %21 = vector.load %arg7[%c0_21, %c8, %c0_22] : memref<1x16x128xf32, #tpu.memory_space<vmem>>, vector<1x1x128xf32>
    %22 = vector.shape_cast %21 : vector<1x1x128xf32> to vector<1x128xf32>
    %c0_23 = arith.constant 0 : index
    %c9 = arith.constant 9 : index
    %c0_24 = arith.constant 0 : index
    %23 = vector.load %arg7[%c0_23, %c9, %c0_24] : memref<1x16x128xf32, #tpu.memory_space<vmem>>, vector<1x1x128xf32>
    %24 = vector.shape_cast %23 : vector<1x1x128xf32> to vector<1x128xf32>
    %c0_25 = arith.constant 0 : index
    %c10 = arith.constant 10 : index
    %c0_26 = arith.constant 0 : index
    %25 = vector.load %arg7[%c0_25, %c10, %c0_26] : memref<1x16x128xf32, #tpu.memory_space<vmem>>, vector<1x1x128xf32>
    %26 = vector.shape_cast %25 : vector<1x1x128xf32> to vector<1x128xf32>
    %c0_27 = arith.constant 0 : index
    %c0_28 = arith.constant 0 : index
    %c0_29 = arith.constant 0 : index
    %27 = vector.load %arg6[%c0_27, %c0_28, %c0_29] : memref<1x256x128xf32, #tpu.memory_space<vmem>>, vector<1x128x128xf32>
    %28 = vector.shape_cast %27 : vector<1x128x128xf32> to vector<128x128xf32>
    %cst = arith.constant dense<0.000000e+00> : vector<8x128xf32>
    %29 = tpu.matmul %3, %28, %cst {dimension_numbers = #tpu.dot_dimension_numbers<[1], [0], [0], [1], [0, 0, 1, 1], [], []>} : vector<8x128xf32>, vector<128x128xf32>, vector<8x128xf32> -> vector<8x128xf32>
    %30 = vector.broadcast %6 : vector<1x128xf32> to vector<8x128xf32>
    %31 = arith.addf %29, %30 : vector<8x128xf32>
    %cst_30 = arith.constant dense<0.000000e+00> : vector<8xf32>
    %32 = vector.multi_reduction <add>, %31, %cst_30 [1] : vector<8x128xf32> to vector<8xf32>
    %33 = vector.shape_cast %32 : vector<8xf32> to vector<8x1xf32>
    %cst_31 = arith.constant 3.125000e-02 : f32
    %34 = vector.broadcast %cst_31 : f32 to vector<8x1xf32>
    %35 = arith.mulf %33, %34 : vector<8x1xf32>
    %36 = arith.mulf %31, %31 : vector<8x128xf32>
    %cst_32 = arith.constant dense<0.000000e+00> : vector<8xf32>
    %37 = vector.multi_reduction <add>, %36, %cst_32 [1] : vector<8x128xf32> to vector<8xf32>
    %38 = vector.shape_cast %37 : vector<8xf32> to vector<8x1xf32>
    %cst_33 = arith.constant 3.125000e-02 : f32
    %39 = vector.broadcast %cst_33 : f32 to vector<8x1xf32>
    %40 = arith.mulf %38, %39 : vector<8x1xf32>
    %41 = arith.mulf %35, %35 : vector<8x1xf32>
    %42 = arith.subf %40, %41 : vector<8x1xf32>
    %43 = vector.broadcast %35 : vector<8x1xf32> to vector<8x128xf32>
    %44 = arith.subf %31, %43 : vector<8x128xf32>
    %cst_34 = arith.constant 9.99999974E-6 : f32
    %45 = vector.broadcast %cst_34 : f32 to vector<8x1xf32>
    %46 = arith.addf %42, %45 : vector<8x1xf32>
    %47 = math.rsqrt %46 : vector<8x1xf32>
    %48 = vector.broadcast %47 : vector<8x1xf32> to vector<8x128xf32>
    %49 = arith.mulf %44, %48 : vector<8x128xf32>
    %50 = vector.broadcast %8 : vector<1x128xf32> to vector<8x128xf32>
    %51 = arith.mulf %49, %50 : vector<8x128xf32>
    %52 = vector.broadcast %10 : vector<1x128xf32> to vector<8x128xf32>
    %53 = arith.addf %51, %52 : vector<8x128xf32>
    %cst_35 = arith.constant dense<0.000000e+00> : vector<8xf32>
    %54 = vector.multi_reduction <add>, %4, %cst_35 [1] : vector<8x128xf32> to vector<8xf32>
    %55 = vector.shape_cast %54 : vector<8xf32> to vector<8x1xf32>
    %cst_36 = arith.constant 3.125000e-02 : f32
    %56 = vector.broadcast %cst_36 : f32 to vector<8x1xf32>
    %57 = arith.mulf %55, %56 : vector<8x1xf32>
    %58 = arith.mulf %4, %4 : vector<8x128xf32>
    %cst_37 = arith.constant dense<0.000000e+00> : vector<8xf32>
    %59 = vector.multi_reduction <add>, %58, %cst_37 [1] : vector<8x128xf32> to vector<8xf32>
    %60 = vector.shape_cast %59 : vector<8xf32> to vector<8x1xf32>
    %cst_38 = arith.constant 3.125000e-02 : f32
    %61 = vector.broadcast %cst_38 : f32 to vector<8x1xf32>
    %62 = arith.mulf %60, %61 : vector<8x1xf32>
    %63 = arith.mulf %57, %57 : vector<8x1xf32>
    %64 = arith.subf %62, %63 : vector<8x1xf32>
    %65 = vector.broadcast %57 : vector<8x1xf32> to vector<8x128xf32>
    %66 = arith.subf %4, %65 : vector<8x128xf32>
    %cst_39 = arith.constant 9.99999974E-6 : f32
    %67 = vector.broadcast %cst_39 : f32 to vector<8x1xf32>
    %68 = arith.addf %64, %67 : vector<8x1xf32>
    %69 = math.rsqrt %68 : vector<8x1xf32>
    %70 = vector.broadcast %69 : vector<8x1xf32> to vector<8x128xf32>
    %71 = arith.mulf %66, %70 : vector<8x128xf32>
    %72 = vector.broadcast %12 : vector<1x128xf32> to vector<8x128xf32>
    %73 = arith.mulf %71, %72 : vector<8x128xf32>
    %74 = vector.broadcast %14 : vector<1x128xf32> to vector<8x128xf32>
    %75 = arith.addf %73, %74 : vector<8x128xf32>
    %c0_40 = arith.constant 0 : index
    %c0_41 = arith.constant 0 : index
    %c0_42 = arith.constant 0 : index
    %76 = vector.load %arg5[%c0_40, %c0_41, %c0_42] : memref<1x128x768xf32, #tpu.memory_space<vmem>>, vector<1x128x384xf32>
    %77 = vector.shape_cast %76 : vector<1x128x384xf32> to vector<128x384xf32>
    %cst_43 = arith.constant dense<0.000000e+00> : vector<8x384xf32>
    %78 = tpu.matmul %53, %77, %cst_43 {dimension_numbers = #tpu.dot_dimension_numbers<[1], [0], [0], [1], [0, 0, 1, 1], [], []>} : vector<8x128xf32>, vector<128x384xf32>, vector<8x384xf32> -> vector<8x384xf32>
    %c0_44 = arith.constant 0 : index
    %c0_45 = arith.constant 0 : index
    %c128 = arith.constant 128 : index
    %79 = vector.load %arg5[%c0_44, %c0_45, %c128] : memref<1x128x768xf32, #tpu.memory_space<vmem>>, vector<1x128x256xf32>
    %80 = vector.shape_cast %79 : vector<1x128x256xf32> to vector<128x256xf32>
    %cst_46 = arith.constant dense<0.000000e+00> : vector<8x256xf32>
    %81 = tpu.matmul %75, %80, %cst_46 {dimension_numbers = #tpu.dot_dimension_numbers<[1], [0], [0], [1], [0, 0, 1, 1], [], []>} : vector<8x128xf32>, vector<128x256xf32>, vector<8x256xf32> -> vector<8x256xf32>
    %82 = vector.extract_strided_slice %78 {offsets = [0, 0], sizes = [8, 128], strides = [1, 1]} : vector<8x384xf32> to vector<8x128xf32>
    %83 = vector.extract_strided_slice %78 {offsets = [0, 128], sizes = [8, 128], strides = [1, 1]} : vector<8x384xf32> to vector<8x128xf32>
    %84 = vector.extract_strided_slice %78 {offsets = [0, 256], sizes = [8, 128], strides = [1, 1]} : vector<8x384xf32> to vector<8x128xf32>
    %85 = vector.extract_strided_slice %81 {offsets = [0, 0], sizes = [8, 128], strides = [1, 1]} : vector<8x256xf32> to vector<8x128xf32>
    %86 = vector.extract_strided_slice %81 {offsets = [0, 128], sizes = [8, 128], strides = [1, 1]} : vector<8x256xf32> to vector<8x128xf32>
    %c0_47 = arith.constant 0 : index
    %c0_48 = arith.constant 0 : index
    %87 = vector.load %arg4[%c0_47, %c0_48] : memref<128x128xf32, #tpu.memory_space<vmem>>, vector<128x128xf32>
    %88 = arith.mulf %82, %83 : vector<8x128xf32>
    %cst_49 = arith.constant dense<0.000000e+00> : vector<8x128xf32>
    %89 = tpu.matmul %88, %87, %cst_49 {dimension_numbers = #tpu.dot_dimension_numbers<[1], [0], [0], [1], [0, 0, 1, 1], [], []>} : vector<8x128xf32>, vector<128x128xf32>, vector<8x128xf32> -> vector<8x128xf32>
    %90 = arith.mulf %82, %85 : vector<8x128xf32>
    %cst_50 = arith.constant dense<0.000000e+00> : vector<8x128xf32>
    %91 = tpu.matmul %90, %87, %cst_50 {dimension_numbers = #tpu.dot_dimension_numbers<[1], [0], [0], [1], [0, 0, 1, 1], [], []>} : vector<8x128xf32>, vector<128x128xf32>, vector<8x128xf32> -> vector<8x128xf32>
    %92 = arith.maximumf %89, %91 : vector<8x128xf32>
    %93 = arith.subf %89, %92 : vector<8x128xf32>
    %94 = math.exp %93 : vector<8x128xf32>
    %95 = arith.subf %91, %92 : vector<8x128xf32>
    %96 = math.exp %95 : vector<8x128xf32>
    %97 = arith.addf %94, %96 : vector<8x128xf32>
    %98 = tpu.reciprocal %97 {approx = true} : vector<8x128xf32> -> vector<8x128xf32>
    %99 = arith.mulf %94, %98 : vector<8x128xf32>
    %100 = arith.mulf %99, %84 : vector<8x128xf32>
    %101 = arith.mulf %96, %98 : vector<8x128xf32>
    %102 = arith.mulf %101, %86 : vector<8x128xf32>
    %103 = arith.addf %100, %102 : vector<8x128xf32>
    %104 = arith.addf %103, %53 : vector<8x128xf32>
    %c0_51 = arith.constant 0 : index
    %c0_52 = arith.constant 0 : index
    %c384 = arith.constant 384 : index
    %105 = vector.load %arg5[%c0_51, %c0_52, %c384] : memref<1x128x768xf32, #tpu.memory_space<vmem>>, vector<1x128x128xf32>
    %106 = vector.shape_cast %105 : vector<1x128x128xf32> to vector<128x128xf32>
    %cst_53 = arith.constant dense<0.000000e+00> : vector<8x128xf32>
    %107 = tpu.matmul %104, %106, %cst_53 {dimension_numbers = #tpu.dot_dimension_numbers<[1], [0], [0], [1], [0, 0, 1, 1], [], []>} : vector<8x128xf32>, vector<128x128xf32>, vector<8x128xf32> -> vector<8x128xf32>
    %108 = vector.broadcast %16 : vector<1x128xf32> to vector<8x128xf32>
    %109 = arith.addf %107, %108 : vector<8x128xf32>
    %110 = arith.addf %53, %109 : vector<8x128xf32>
    %cst_54 = arith.constant dense<0.000000e+00> : vector<8xf32>
    %111 = vector.multi_reduction <add>, %110, %cst_54 [1] : vector<8x128xf32> to vector<8xf32>
    %112 = vector.shape_cast %111 : vector<8xf32> to vector<8x1xf32>
    %cst_55 = arith.constant 3.125000e-02 : f32
    %113 = vector.broadcast %cst_55 : f32 to vector<8x1xf32>
    %114 = arith.mulf %112, %113 : vector<8x1xf32>
    %115 = arith.mulf %110, %110 : vector<8x128xf32>
    %cst_56 = arith.constant dense<0.000000e+00> : vector<8xf32>
    %116 = vector.multi_reduction <add>, %115, %cst_56 [1] : vector<8x128xf32> to vector<8xf32>
    %117 = vector.shape_cast %116 : vector<8xf32> to vector<8x1xf32>
    %cst_57 = arith.constant 3.125000e-02 : f32
    %118 = vector.broadcast %cst_57 : f32 to vector<8x1xf32>
    %119 = arith.mulf %117, %118 : vector<8x1xf32>
    %120 = arith.mulf %114, %114 : vector<8x1xf32>
    %121 = arith.subf %119, %120 : vector<8x1xf32>
    %122 = vector.broadcast %114 : vector<8x1xf32> to vector<8x128xf32>
    %123 = arith.subf %110, %122 : vector<8x128xf32>
    %cst_58 = arith.constant 9.99999974E-6 : f32
    %124 = vector.broadcast %cst_58 : f32 to vector<8x1xf32>
    %125 = arith.addf %121, %124 : vector<8x1xf32>
    %126 = math.rsqrt %125 : vector<8x1xf32>
    %127 = vector.broadcast %126 : vector<8x1xf32> to vector<8x128xf32>
    %128 = arith.mulf %123, %127 : vector<8x128xf32>
    %129 = vector.broadcast %18 : vector<1x128xf32> to vector<8x128xf32>
    %130 = arith.mulf %128, %129 : vector<8x128xf32>
    %131 = vector.broadcast %20 : vector<1x128xf32> to vector<8x128xf32>
    %132 = arith.addf %130, %131 : vector<8x128xf32>
    %c0_59 = arith.constant 0 : index
    %c0_60 = arith.constant 0 : index
    %c512 = arith.constant 512 : index
    %133 = vector.load %arg5[%c0_59, %c0_60, %c512] : memref<1x128x768xf32, #tpu.memory_space<vmem>>, vector<1x128x128xf32>
    %134 = vector.shape_cast %133 : vector<1x128x128xf32> to vector<128x128xf32>
    %cst_61 = arith.constant dense<0.000000e+00> : vector<8x128xf32>
    %135 = tpu.matmul %132, %134, %cst_61 {dimension_numbers = #tpu.dot_dimension_numbers<[1], [0], [0], [1], [0, 0, 1, 1], [], []>} : vector<8x128xf32>, vector<128x128xf32>, vector<8x128xf32> -> vector<8x128xf32>
    %136 = vector.broadcast %22 : vector<1x128xf32> to vector<8x128xf32>
    %137 = arith.addf %135, %136 : vector<8x128xf32>
    %cst_62 = arith.constant 5.000000e-01 : f32
    %138 = vector.broadcast %cst_62 : f32 to vector<8x128xf32>
    %139 = arith.mulf %138, %137 : vector<8x128xf32>
    %cst_63 = arith.constant 0.707106769 : f32
    %140 = vector.broadcast %cst_63 : f32 to vector<8x128xf32>
    %141 = arith.mulf %137, %140 : vector<8x128xf32>
    %cst_64 = arith.constant 0.000000e+00 : f32
    %142 = vector.broadcast %cst_64 : f32 to vector<8x128xf32>
    %143 = arith.cmpf oge, %141, %142 : vector<8x128xf32>
    %cst_65 = arith.constant 1.000000e+00 : f32
    %cst_66 = arith.constant -1.000000e+00 : f32
    %144 = vector.broadcast %cst_65 : f32 to vector<8x128xf32>
    %145 = vector.broadcast %cst_66 : f32 to vector<8x128xf32>
    %146 = arith.select %143, %144, %145 : vector<8x128xi1>, vector<8x128xf32>
    %147 = math.absf %141 : vector<8x128xf32>
    %cst_67 = arith.constant 0.327591091 : f32
    %148 = vector.broadcast %cst_67 : f32 to vector<8x128xf32>
    %149 = arith.mulf %148, %147 : vector<8x128xf32>
    %cst_68 = arith.constant 1.000000e+00 : f32
    %150 = vector.broadcast %cst_68 : f32 to vector<8x128xf32>
    %151 = arith.addf %150, %149 : vector<8x128xf32>
    %cst_69 = arith.constant 1.000000e+00 : f32
    %152 = vector.broadcast %cst_69 : f32 to vector<8x128xf32>
    %153 = arith.divf %152, %151 : vector<8x128xf32>
    %cst_70 = arith.constant 1.06140542 : f32
    %154 = vector.broadcast %cst_70 : f32 to vector<8x128xf32>
    %155 = arith.mulf %154, %153 : vector<8x128xf32>
    %cst_71 = arith.constant -1.45315206 : f32
    %156 = vector.broadcast %cst_71 : f32 to vector<8x128xf32>
    %157 = arith.addf %155, %156 : vector<8x128xf32>
    %158 = arith.mulf %157, %153 : vector<8x128xf32>
    %cst_72 = arith.constant 1.42141378 : f32
    %159 = vector.broadcast %cst_72 : f32 to vector<8x128xf32>
    %160 = arith.addf %158, %159 : vector<8x128xf32>
    %161 = arith.mulf %160, %153 : vector<8x128xf32>
    %cst_73 = arith.constant -0.284496725 : f32
    %162 = vector.broadcast %cst_73 : f32 to vector<8x128xf32>
    %163 = arith.addf %161, %162 : vector<8x128xf32>
    %164 = arith.mulf %163, %153 : vector<8x128xf32>
    %cst_74 = arith.constant 0.254829586 : f32
    %165 = vector.broadcast %cst_74 : f32 to vector<8x128xf32>
    %166 = arith.addf %164, %165 : vector<8x128xf32>
    %167 = arith.mulf %166, %153 : vector<8x128xf32>
    %cst_75 = arith.constant 0.000000e+00 : f32
    %168 = vector.broadcast %cst_75 : f32 to vector<8x128xf32>
    %169 = arith.subf %168, %147 : vector<8x128xf32>
    %170 = arith.mulf %169, %147 : vector<8x128xf32>
    %171 = math.exp %170 : vector<8x128xf32>
    %172 = arith.mulf %167, %171 : vector<8x128xf32>
    %cst_76 = arith.constant 1.000000e+00 : f32
    %173 = vector.broadcast %cst_76 : f32 to vector<8x128xf32>
    %174 = arith.subf %173, %172 : vector<8x128xf32>
    %175 = arith.mulf %146, %174 : vector<8x128xf32>
    %cst_77 = arith.constant 1.000000e+00 : f32
    %176 = vector.broadcast %cst_77 : f32 to vector<8x128xf32>
    %177 = arith.addf %176, %175 : vector<8x128xf32>
    %178 = arith.mulf %139, %177 : vector<8x128xf32>
    %c0_78 = arith.constant 0 : index
    %c128_79 = arith.constant 128 : index
    %c0_80 = arith.constant 0 : index
    %179 = vector.load %arg6[%c0_78, %c128_79, %c0_80] : memref<1x256x128xf32, #tpu.memory_space<vmem>>, vector<1x128x128xf32>
    %180 = vector.shape_cast %179 : vector<1x128x128xf32> to vector<128x128xf32>
    %cst_81 = arith.constant dense<0.000000e+00> : vector<8x128xf32>
    %181 = tpu.matmul %178, %180, %cst_81 {dimension_numbers = #tpu.dot_dimension_numbers<[1], [0], [0], [1], [0, 0, 1, 1], [], []>} : vector<8x128xf32>, vector<128x128xf32>, vector<8x128xf32> -> vector<8x128xf32>
    %182 = vector.broadcast %24 : vector<1x128xf32> to vector<8x128xf32>
    %183 = arith.addf %181, %182 : vector<8x128xf32>
    %184 = arith.addf %110, %183 : vector<8x128xf32>
    %c0_82 = arith.constant 0 : index
    %c0_83 = arith.constant 0 : index
    %c640 = arith.constant 640 : index
    %185 = vector.load %arg5[%c0_82, %c0_83, %c640] : memref<1x128x768xf32, #tpu.memory_space<vmem>>, vector<1x128x128xf32>
    %186 = vector.shape_cast %185 : vector<1x128x128xf32> to vector<128x128xf32>
    %cst_84 = arith.constant dense<0.000000e+00> : vector<8x128xf32>
    %187 = tpu.matmul %184, %186, %cst_84 {dimension_numbers = #tpu.dot_dimension_numbers<[1], [0], [0], [1], [0, 0, 1, 1], [], []>} : vector<8x128xf32>, vector<128x128xf32>, vector<8x128xf32> -> vector<8x128xf32>
    %188 = vector.broadcast %26 : vector<1x128xf32> to vector<8x128xf32>
    %189 = arith.addf %187, %188 : vector<8x128xf32>
    %190 = arith.addf %3, %189 : vector<8x128xf32>
    %c0_85 = arith.constant 0 : index
    %c0_86 = arith.constant 0 : index
    %191 = vector.load %arg8[%c0_85, %c0_86] : memref<8x128xf32, #tpu.memory_space<vmem>>, vector<8x128xf32>
    tpu.vector_store %arg8[%c0_85, %c0_86], %190 {strides = array<i32>} : memref<8x128xf32, #tpu.memory_space<vmem>>, vector<8x128xf32>,
    return
  }
  func.func @transform_0(%arg0: i32, %arg1: i32) -> (i32, i32) {
    %c0_i32 = arith.constant 0 : i32
    %c0_i32_0 = arith.constant 0 : i32
    return %arg0, %c0_i32 : i32, i32
  }
  func.func @transform_1(%arg0: i32, %arg1: i32) -> (i32, i32) {
    %c0_i32 = arith.constant 0 : i32
    %c0_i32_0 = arith.constant 0 : i32
    return %arg0, %c0_i32 : i32, i32
  }
  func.func @transform_2(%arg0: i32, %arg1: i32) -> (i32, i32) {
    %c0_i32 = arith.constant 0 : i32
    %c0_i32_0 = arith.constant 0 : i32
    %c0_i32_1 = arith.constant 0 : i32
    return %c0_i32, %c0_i32_0 : i32, i32
  }
  func.func @transform_3(%arg0: i32, %arg1: i32) -> (i32, i32, i32) {
    %c0_i32 = arith.constant 0 : i32
    %c0_i32_0 = arith.constant 0 : i32
    %c0_i32_1 = arith.constant 0 : i32
    return %arg1, %c0_i32, %c0_i32_0 : i32, i32, i32
  }
  func.func @transform_4(%arg0: i32, %arg1: i32) -> (i32, i32, i32) {
    %c0_i32 = arith.constant 0 : i32
    %c0_i32_0 = arith.constant 0 : i32
    %c0_i32_1 = arith.constant 0 : i32
    return %arg1, %c0_i32, %c0_i32_0 : i32, i32, i32
  }
  func.func @transform_5(%arg0: i32, %arg1: i32) -> (i32, i32, i32) {
    %c0_i32 = arith.constant 0 : i32
    %c0_i32_0 = arith.constant 0 : i32
    %c0_i32_1 = arith.constant 0 : i32
    return %arg1, %c0_i32, %c0_i32_0 : i32, i32, i32
  }
  func.func @transform_6(%arg0: i32, %arg1: i32) -> (i32, i32) {
    %c0_i32 = arith.constant 0 : i32
    %c0_i32_0 = arith.constant 0 : i32
    return %arg0, %c0_i32 : i32, i32
  }
}

</mosaic_0001>

<llo_original>
// kernel: tpu_custom_call.1
$region0: #{tpu_custom_call.1}
  #allocation0 [shape = 'u32[]', space=smem, size = 0x4, offset = 0x4, fixed_abs, tag = 'smem constant byte address 0x4 - core index']
  #allocation1 [shape = 'u32[144,128]{1,0:T(1,128)}', space=vmem, size = 0x12000, scoped, tag = 'internal scratch']
  %s0 = inlined_call_operand.hbm [shape: f32[8,128], index: 0, kind: input, shape index: {}, may-alias: {0,6}]
  %s1 = inlined_call_operand.hbm [shape: f32[8,128], index: 1, kind: input, shape index: {}]
  %s2 = inlined_call_operand.hbm [shape: f32[128,128], index: 2, kind: input, shape index: {}]
  %s3 = inlined_call_operand.hbm [shape: f32[2,128,768], index: 3, kind: input, shape index: {}]
  %s4 = inlined_call_operand.hbm [shape: f32[2,256,128], index: 4, kind: input, shape index: {}]
  %s5 = inlined_call_operand.vmem [shape: f32[2,16,128], index: 5, kind: input, shape index: {}]
  %s6 = inlined_call_operand.hbm [shape: f32[8,128], index: 6, kind: output, shape index: {}, may-alias: {0,6}]
  %s7 = sld [smem:[#allocation0]]
  $region81: #{tpu_custom_call.1} parent=0
    _
  %s9 = ssub.s32 1, %s7
  %s10 = scalar_select 0, %s9, %s7
  $region1: #{tpu_custom_call.1} parent=0
    #allocation2 [shape = 'u8[4096]{0}', space=vmem, size = 0x1000, scoped, tag = 'input window, operand 0, single buffered']
    #allocation3 [shape = 's32[2]{0}', space=sflag, size = 0x8, scoped, tag = 'scoped memory for tpu_custom_call.1']
    #allocation4 [shape = 's32[2]{0}', space=sflag, size = 0x8, scoped, tag = 'scoped memory for tpu_custom_call.1']
    #allocation5 [shape = 'u8[4096]{0}', space=vmem, size = 0x1000, scoped, tag = 'input window, operand 1, single buffered']
    #allocation6 [shape = 's32[1]{0}', space=sflag, size = 0x4, scoped, tag = 'scoped memory for tpu_custom_call.1']
    #allocation7 [shape = 'u8[65536]{0}', space=vmem, size = 0x10000, scoped, tag = 'input window, operand 2, single buffered']
    #allocation8 [shape = 'u8[786432]{0}', space=vmem, size = 0xc0000, scoped, tag = 'input window, operand 3']
    #allocation9 [shape = 's32[2]{0}', space=sflag, size = 0x8, scoped, tag = 'scoped memory for tpu_custom_call.1']
    #allocation10 [shape = 'u8[262144]{0}', space=vmem, size = 0x40000, scoped, tag = 'input window, operand 4']
    #allocation11 [shape = 'u8[4096]{0}', space=vmem, size = 0x1000, scoped, tag = 'output window, operand 0, single buffered']
    %11 = vsyncpa [#allocation3], 0
    %12 = vsyncpa [#allocation6], 0
    %13 = vsyncpa [#allocation9], 0
    %s14 = scalar_lea.sflag [#allocation9], 1
    %15 = vsyncpa %s14, 0
    %16 = vsyncpa [#allocation4], 0
    loop: start=0, step=1, limit=4
    $region2: #{tpu_custom_call.1} parent=1 // loop_pre_header
      _
    $region3: #{tpu_custom_call.1} parent=1 // loop_header
      %s18 = sphi 0, %s22
      %p19 = scmp.ge.s32.totalorder %s18, 4
      %s25 = sphi 0, %s37
      %s26 = sphi 0, %s33
      %s27 = sphi 0, %s25
      %s28 = sphi 0, %s26
      %s29 = sphi 0, %s27
      %s30 = sphi 0, %s28
      %s40 = sphi 0, %s42
      %s43 = sphi 0, %s40
      %s44 = sphi 0, %s43
      %s60 = sphi 0, %s44
      %s66 = sphi 0, %s68
      %s69 = sphi 0, %s66
      %s70 = sphi 0, %s69
      %s86 = sphi 0, %s70
      %s90 = sphi 0, %s90
      %s92 = sphi 0, %s90
      %s93 = sphi 0, %s92
      %s107 = sphi 0, %s93
      %s113 = sphi 0, %s115
      %s116 = sphi 0, %s113
      %s117 = sphi 0, %s116
      %s133 = sphi 0, %s117
      %s139 = sphi 0, %s141
      %s142 = sphi 0, %s139
      %s143 = sphi 0, %s142
      %s159 = sphi 0, %s143
      %s165 = sphi 0, %s167
      %s168 = sphi 0, %s165
      %s169 = sphi 0, %s168
      %s185 = sphi 0, %s169
      %s191 = sphi 0, %s193
      %s194 = sphi 0, %s191
      %s195 = sphi 0, %s194
      %s211 = sphi 0, %s195
    $region4: #{tpu_custom_call.1} parent=1 // loop_header_branch
      %21 = sbr.rel (%p19) target = $region8
    $region5: #{tpu_custom_call.1} parent=1 // loop_body
      %s23 = ssub.s32 %s18, 1
      %s24 = ssub.s32 %s18, 2
      %s31 = sadd.s32 1, %s26
      %p32 = scmp.ge.s32.totalorder %s31, 2
      %s33 = scalar_select %p32, 0, %s31
      %s34 = sadd.s32 1, %s25
      %s35 = scalar_select %p32, %s34, %s25
      %p36 = scmp.ge.s32.totalorder %s35, 1
      %s37 = scalar_select %p36, 0, %s35
      %s38 = ssub.s32 %s25, %s37
      %p39 = scmp.eq.s32.totalorder %s38, 0
      %s41 = sadd.s32 %s40, 1
      %s42 = scalar_select %p39, %s40, %s41
      %p45 = pneg %p39
      %p46 = scmp.eq.s32.totalorder %s18, 1
      %p47 = por %p45, %p46
      %p48 = scmp.ne.s32.totalorder %s40, %s43
      %p49 = scmp.eq.s32.totalorder %s18, 0
      %p50 = por %p48, %p49
      %p51 = scmp.ne.s32.totalorder %s40, %s43
      %p52 = scmp.eq.s32.totalorder %s23, 1
      %p53 = por %p51, %p52
      %p54 = scmp.ne.s32.totalorder %s43, %s44
      %p55 = scmp.eq.s32.totalorder %s23, 0
      %p56 = por %p54, %p55
      %p57 = scmp.ne.s32.totalorder %s43, %s44
      %p58 = scmp.eq.s32.totalorder %s24, 1
      %p59 = por %p57, %p58
      %p61 = scmp.ne.s32.totalorder %s44, %s60
      %p62 = scmp.eq.s32.totalorder %s24, 0
      %p63 = por %p61, %p62
      %s64 = ssub.s32 %s25, %s37
      %p65 = scmp.eq.s32.totalorder %s64, 0
      %s67 = sadd.s32 %s66, 1
      %s68 = scalar_select %p65, %s66, %s67
      %p71 = pneg %p65
      %p72 = scmp.eq.s32.totalorder %s18, 1
      %p73 = por %p71, %p72
      %p74 = scmp.ne.s32.totalorder %s66, %s69
      %p75 = scmp.eq.s32.totalorder %s18, 0
      %p76 = por %p74, %p75
      %p77 = scmp.ne.s32.totalorder %s66, %s69
      %p78 = scmp.eq.s32.totalorder %s23, 1
      %p79 = por %p77, %p78
      %p80 = scmp.ne.s32.totalorder %s69, %s70
      %p81 = scmp.eq.s32.totalorder %s23, 0
      %p82 = por %p80, %p81
      %p83 = scmp.ne.s32.totalorder %s69, %s70
      %p84 = scmp.eq.s32.totalorder %s24, 1
      %p85 = por %p83, %p84
      %p87 = scmp.ne.s32.totalorder %s70, %s86
      %p88 = scmp.eq.s32.totalorder %s24, 0
      %p89 = por %p87, %p88
      %s91 = sadd.s32 %s90, 1
      %p94 = scmp.eq.s32.totalorder %s18, 1
      %p95 = scmp.ne.s32.totalorder %s90, %s92
      %p96 = scmp.eq.s32.totalorder %s18, 0
      %p97 = por %p95, %p96
      %p98 = scmp.ne.s32.totalorder %s90, %s92
      %p99 = scmp.eq.s32.totalorder %s23, 1
      %p100 = por %p98, %p99
      %p101 = scmp.ne.s32.totalorder %s92, %s93
      %p102 = scmp.eq.s32.totalorder %s23, 0
      %p103 = por %p101, %p102
      %p104 = scmp.ne.s32.totalorder %s92, %s93
      %p105 = scmp.eq.s32.totalorder %s24, 1
      %p106 = por %p104, %p105
      %p108 = scmp.ne.s32.totalorder %s93, %s107
      %p109 = scmp.eq.s32.totalorder %s24, 0
      %p110 = por %p108, %p109
      %s111 = ssub.s32 %s26, %s33
      %p112 = scmp.eq.s32.totalorder %s111, 0
      %s114 = sadd.s32 %s113, 1
      %s115 = scalar_select %p112, %s113, %s114
      %p118 = pneg %p112
      %p119 = scmp.eq.s32.totalorder %s18, 1
      %p120 = por %p118, %p119
      %p121 = scmp.ne.s32.totalorder %s113, %s116
      %p122 = scmp.eq.s32.totalorder %s18, 0
      %p123 = por %p121, %p122
      %p124 = scmp.ne.s32.totalorder %s113, %s116
      %p125 = scmp.eq.s32.totalorder %s23, 1
      %p126 = por %p124, %p125
      %p127 = scmp.ne.s32.totalorder %s116, %s117
      %p128 = scmp.eq.s32.totalorder %s23, 0
      %p129 = por %p127, %p128
      %p130 = scmp.ne.s32.totalorder %s116, %s117
      %p131 = scmp.eq.s32.totalorder %s24, 1
      %p132 = por %p130, %p131
      %p134 = scmp.ne.s32.totalorder %s117, %s133
      %p135 = scmp.eq.s32.totalorder %s24, 0
      %p136 = por %p134, %p135
      %s137 = ssub.s32 %s26, %s33
      %p138 = scmp.eq.s32.totalorder %s137, 0
      %s140 = sadd.s32 %s139, 1
      %s141 = scalar_select %p138, %s139, %s140
      %p144 = pneg %p138
      %p145 = scmp.eq.s32.totalorder %s18, 1
      %p146 = por %p144, %p145
      %p147 = scmp.ne.s32.totalorder %s139, %s142
      %p148 = scmp.eq.s32.totalorder %s18, 0
      %p149 = por %p147, %p148
      %p150 = scmp.ne.s32.totalorder %s139, %s142
      %p151 = scmp.eq.s32.totalorder %s23, 1
      %p152 = por %p150, %p151
      %p153 = scmp.ne.s32.totalorder %s142, %s143
      %p154 = scmp.eq.s32.totalorder %s23, 0
      %p155 = por %p153, %p154
      %p156 = scmp.ne.s32.totalorder %s142, %s143
      %p157 = scmp.eq.s32.totalorder %s24, 1
      %p158 = por %p156, %p157
      %p160 = scmp.ne.s32.totalorder %s143, %s159
      %p161 = scmp.eq.s32.totalorder %s24, 0
      %p162 = por %p160, %p161
      %s163 = ssub.s32 %s26, %s33
      %p164 = scmp.eq.s32.totalorder %s163, 0
      %s166 = sadd.s32 %s165, 1
      %s167 = scalar_select %p164, %s165, %s166
      %p170 = pneg %p164
      %p171 = scmp.eq.s32.totalorder %s18, 1
      %p172 = por %p170, %p171
      %p173 = scmp.ne.s32.totalorder %s165, %s168
      %p174 = scmp.eq.s32.totalorder %s18, 0
      %p175 = por %p173, %p174
      %p176 = scmp.ne.s32.totalorder %s165, %s168
      %p177 = scmp.eq.s32.totalorder %s23, 1
      %p178 = por %p176, %p177
      %p179 = scmp.ne.s32.totalorder %s168, %s169
      %p180 = scmp.eq.s32.totalorder %s23, 0
      %p181 = por %p179, %p180
      %p182 = scmp.ne.s32.totalorder %s168, %s169
      %p183 = scmp.eq.s32.totalorder %s24, 1
      %p184 = por %p182, %p183
      %p186 = scmp.ne.s32.totalorder %s169, %s185
      %p187 = scmp.eq.s32.totalorder %s24, 0
      %p188 = por %p186, %p187
      %s189 = ssub.s32 %s25, %s37
      %p190 = scmp.eq.s32.totalorder %s189, 0
      %s192 = sadd.s32 %s191, 1
      %s193 = scalar_select %p190, %s191, %s192
      %p196 = pneg %p190
      %p197 = scmp.eq.s32.totalorder %s18, 1
      %p198 = por %p196, %p197
      %p199 = scmp.ne.s32.totalorder %s191, %s194
      %p200 = scmp.eq.s32.totalorder %s18, 0
      %p201 = por %p199, %p200
      %p202 = scmp.ne.s32.totalorder %s191, %s194
      %p203 = scmp.eq.s32.totalorder %s23, 1
      %p204 = por %p202, %p203
      %p205 = scmp.ne.s32.totalorder %s194, %s195
      %p206 = scmp.eq.s32.totalorder %s23, 0
      %p207 = por %p205, %p206
      %p208 = scmp.ne.s32.totalorder %s194, %s195
      %p209 = scmp.eq.s32.totalorder %s24, 1
      %p210 = por %p208, %p209
      %p212 = scmp.ne.s32.totalorder %s195, %s211
      %p213 = scmp.eq.s32.totalorder %s24, 0
      %p214 = por %p212, %p213
      %p215 = scmp.le.s32.totalorder 1, %s18
      %p216 = scmp.lt.s32.totalorder %s18, 3
      %p217 = pnand %p215, %p216
      %p218 = pneg %p217
      // Predicated region
      $region9: #{tpu_custom_call.1} parent=5 // pred_check
        _
      $region10: #{tpu_custom_call.1} parent=5 // pred_check_branch
        %220 = sbr.rel (%p217) target = $region12
      $region11: #{tpu_custom_call.1} parent=5 // pred_region
        %s221 = ssub.s32 %s18, 1
        // Predicated region
        $region13: #{tpu_custom_call.1} parent=11 // pred_check
          %p222 = pneg %p56
        $region14: #{tpu_custom_call.1} parent=11 // pred_check_branch
          %224 = sbr.rel (%p222) target = $region16
        $region15: #{tpu_custom_call.1} parent=11 // pred_region
          %s226 = ssub.s32 128, 128
          %227 = vsyncadd [#allocation3], %s226
          %s228 = smul.addr %s27, 128
          %s229 = scalar_lea.hbm %s0, %s228
          %s231 = sshll.u32 [#allocation2], 4
          %s232 = int_to_ptr.vmem [resolvable:$true] %s231
          %234 = dma.hbm_to_vmem [thread:$0]  %s229, 128, %s232, [#allocation3]
        $region16: #{tpu_custom_call.1} parent=11 // pred_fallthru
          _
        // Predicated region
        $region17: #{tpu_custom_call.1} parent=11 // pred_check
          %p235 = pneg %p82
        $region18: #{tpu_custom_call.1} parent=11 // pred_check_branch
          %237 = sbr.rel (%p235) target = $region20
        $region19: #{tpu_custom_call.1} parent=11 // pred_region
          %s239 = ssub.s32 128, 128
          %240 = vsyncadd [#allocation6], %s239
          %s241 = smul.addr %s27, 128
          %s242 = scalar_lea.hbm %s1, %s241
          %s244 = sshll.u32 [#allocation5], 4
          %s245 = int_to_ptr.vmem [resolvable:$true] %s244
          %247 = dma.hbm_to_vmem [thread:$0]  %s242, 128, %s245, [#allocation6]
        $region20: #{tpu_custom_call.1} parent=11 // pred_fallthru
          _
        // Predicated region
        $region21: #{tpu_custom_call.1} parent=11 // pred_check
          %p248 = pneg %p103
        $region22: #{tpu_custom_call.1} parent=11 // pred_check_branch
          %250 = sbr.rel (%p248) target = $region24
        $region23: #{tpu_custom_call.1} parent=11 // pred_region
          %s252 = ssub.s32 2048, 2048
          %253 = vsyncadd [#allocation6], %s252
          %s254 = sshll.u32 [#allocation7], 4
          %s255 = int_to_ptr.vmem [resolvable:$true] %s254
          %260 = dma.hbm_to_vmem [thread:$0]  %s2, 2048, %s255, [#allocation6], 128, 128, 8
        $region24: #{tpu_custom_call.1} parent=11 // pred_fallthru
          _
      $region12: #{tpu_custom_call.1} parent=5 // pred_fallthru
        _
      %p261 = scmp.lt.s32.totalorder %s18, 2
      // Predicated region
      $region25: #{tpu_custom_call.1} parent=5 // pred_check
        %p262 = pneg %p261
      $region26: #{tpu_custom_call.1} parent=5 // pred_check_branch
        %264 = sbr.rel (%p262) target = $region28
      $region27: #{tpu_custom_call.1} parent=5 // pred_region
        // Predicated region
        $region29: #{tpu_custom_call.1} parent=27 // pred_check
          %p265 = pneg %p123
        $region30: #{tpu_custom_call.1} parent=27 // pred_check_branch
          %267 = sbr.rel (%p265) target = $region32
        $region31: #{tpu_custom_call.1} parent=27 // pred_region
          %s268 = sand.u32 %s18, 1
          %s269 = scalar_lea.sflag [#allocation9], %s268
          %s270 = sand.u32 %s113, 1
          %s271 = smul.addr %s270, 768
          %s272 = scalar_lea.vmem [#allocation8], %s271
          %s274 = ssub.s32 12288, 12288
          %275 = vsyncadd %s269, %s274
          %s276 = smul.addr %s26, 96
          %s277 = smul.addr %s276, 128
          %s278 = scalar_lea.hbm %s3, %s277
          %s279 = sshll.u32 %s272, 4
          %s280 = int_to_ptr.vmem [resolvable:$true] %s279
          %285 = dma.hbm_to_vmem [thread:$0]  %s278, 12288, %s280, %s269, 768, 768, 48
        $region32: #{tpu_custom_call.1} parent=27 // pred_fallthru
          _
        // Predicated region
        $region33: #{tpu_custom_call.1} parent=27 // pred_check
          %p286 = pneg %p149
        $region34: #{tpu_custom_call.1} parent=27 // pred_check_branch
          %288 = sbr.rel (%p286) target = $region36
        $region35: #{tpu_custom_call.1} parent=27 // pred_region
          %s289 = sand.u32 %s18, 1
          %s290 = scalar_lea.sflag [#allocation9], %s289
          %s291 = sand.u32 %s139, 1
          %s292 = smul.addr %s291, 256
          %s293 = scalar_lea.vmem [#allocation10], %s292
          %s295 = ssub.s32 4096, 4096
          %296 = vsyncadd %s290, %s295
          %s297 = smul.addr %s26, 32
          %s298 = smul.addr %s297, 128
          %s299 = scalar_lea.hbm %s4, %s298
          %s300 = sshll.u32 %s293, 4
          %s301 = int_to_ptr.vmem [resolvable:$true] %s300
          %306 = dma.hbm_to_vmem [thread:$0]  %s299, 4096, %s301, %s290, 128, 128, 8
        $region36: #{tpu_custom_call.1} parent=27 // pred_fallthru
          _
        // Predicated region
        $region37: #{tpu_custom_call.1} parent=27 // pred_check
          %p307 = pneg %p175
        $region38: #{tpu_custom_call.1} parent=27 // pred_check_branch
          %309 = sbr.rel (%p307) target = $region40
        $region39: #{tpu_custom_call.1} parent=27 // pred_region
          %p310 = scmp.lt.s32.totalorder %s26, 1
          %s311 = scalar_select %p310, %s26, 1
          %s312 = smul.addr %s311, 2
          %s313 = smul.addr %s312, 8
          %s314 = scalar_lea.vmem %s5, %s313
        $region40: #{tpu_custom_call.1} parent=27 // pred_fallthru
          _
      $region28: #{tpu_custom_call.1} parent=5 // pred_fallthru
        _
      %p315 = scmp.le.s32.totalorder 1, %s18
      %p316 = scmp.lt.s32.totalorder %s18, 3
      %p317 = pnand %p315, %p316
      %p318 = pneg %p317
      // Predicated region
      $region41: #{tpu_custom_call.1} parent=5 // pred_check
        _
      $region42: #{tpu_custom_call.1} parent=5 // pred_check_branch
        %320 = sbr.rel (%p317) target = $region44
      $region43: #{tpu_custom_call.1} parent=5 // pred_region
        %s321 = ssub.s32 %s18, 1
        // Predicated region
        $region45: #{tpu_custom_call.1} parent=43 // pred_check
          %p322 = pneg %p56
        $region46: #{tpu_custom_call.1} parent=43 // pred_check_branch
          %324 = sbr.rel (%p322) target = $region48
        $region47: #{tpu_custom_call.1} parent=43 // pred_region
          %325 = dma.done [#allocation3], 128
        $region48: #{tpu_custom_call.1} parent=43 // pred_fallthru
          _
        // Predicated region
        $region49: #{tpu_custom_call.1} parent=43 // pred_check
          %p326 = pneg %p82
        $region50: #{tpu_custom_call.1} parent=43 // pred_check_branch
          %328 = sbr.rel (%p326) target = $region52
        $region51: #{tpu_custom_call.1} parent=43 // pred_region
          %329 = dma.done [#allocation6], 128
        $region52: #{tpu_custom_call.1} parent=43 // pred_fallthru
          _
        // Predicated region
        $region53: #{tpu_custom_call.1} parent=43 // pred_check
          %p330 = pneg %p103
        $region54: #{tpu_custom_call.1} parent=43 // pred_check_branch
          %332 = sbr.rel (%p330) target = $region56
        $region55: #{tpu_custom_call.1} parent=43 // pred_region
          %333 = dma.done [#allocation6], 2048
        $region56: #{tpu_custom_call.1} parent=43 // pred_fallthru
          _
        %s334 = sand.u32 %s23, 1
        %s335 = scalar_lea.sflag [#allocation9], %s334
        %s336 = sand.u32 %s116, 1
        %s337 = smul.addr %s336, 768
        %s338 = scalar_lea.vmem [#allocation8], %s337
        // Predicated region
        $region57: #{tpu_custom_call.1} parent=43 // pred_check
          %p339 = pneg %p129
        $region58: #{tpu_custom_call.1} parent=43 // pred_check_branch
          %341 = sbr.rel (%p339) target = $region60
        $region59: #{tpu_custom_call.1} parent=43 // pred_region
          %342 = dma.done %s335, 12288
        $region60: #{tpu_custom_call.1} parent=43 // pred_fallthru
          _
        %s343 = sand.u32 %s23, 1
        %s344 = scalar_lea.sflag [#allocation9], %s343
        %s345 = sand.u32 %s142, 1
        %s346 = smul.addr %s345, 256
        %s347 = scalar_lea.vmem [#allocation10], %s346
        // Predicated region
        $region61: #{tpu_custom_call.1} parent=43 // pred_check
          %p348 = pneg %p155
        $region62: #{tpu_custom_call.1} parent=43 // pred_check_branch
          %350 = sbr.rel (%p348) target = $region64
        $region63: #{tpu_custom_call.1} parent=43 // pred_region
          %351 = dma.done %s344, 4096
        $region64: #{tpu_custom_call.1} parent=43 // pred_fallthru
          _
        %p352 = pneg %p56
        %p353 = pneg %p53
        %p354 = pneg %p82
        %p355 = pneg %p79
        %p356 = pneg %p103
        %p357 = pneg %p100
        %s358 = sand.u32 %s23, 1
        %s359 = scalar_lea.sflag [#allocation9], %s358
        %s360 = sand.u32 %s116, 1
        %s361 = smul.addr %s360, 768
        %s362 = scalar_lea.vmem [#allocation8], %s361
        %p363 = pneg %p129
        %p364 = pneg %p126
        %s365 = sand.u32 %s23, 1
        %s366 = scalar_lea.sflag [#allocation9], %s365
        %s367 = sand.u32 %s142, 1
        %s368 = smul.addr %s367, 256
        %s369 = scalar_lea.vmem [#allocation10], %s368
        %p370 = pneg %p155
        %p371 = pneg %p152
        %p372 = scmp.lt.s32.totalorder %s28, 1
        %s373 = scalar_select %p372, %s28, 1
        %s374 = smul.addr %s373, 2
        %s375 = smul.addr %s374, 8
        %s376 = scalar_lea.vmem %s5, %s375
        %p377 = pneg %p181
        %p378 = pneg %p178
        %p379 = pneg %p207
        %p380 = pneg %p204
        %p381 = scmp.lt.s32.totalorder %s28, 1
        %s382 = scalar_select %p381, %s28, 1
        %s383 = smul.addr %s382, 2
        %s384 = smul.addr %s383, 8
        %s385 = scalar_lea.vmem %s5, %s384
        %p386 = scmp.eq.s32.totalorder %s28, 0
        // Predicated region
        $region65: #{tpu_custom_call.1} parent=43 // pred_check
          %p387 = pneg %p386
        $region66: #{tpu_custom_call.1} parent=43 // pred_check_branch
          %389 = sbr.rel (%p387) target = $region68
        $region67: #{tpu_custom_call.1} parent=43 // pred_region
          %v390 = vld [vmem:[#allocation2] sm:$0xff]
          %391 = vst [vmem:[#allocation11] sm:$0xff] %v390
        $region68: #{tpu_custom_call.1} parent=43 // pred_fallthru
          _
        %v392 = vld [vmem:[#allocation11] sm:$0xff]
        %v393 = vld [vmem:[#allocation5] sm:$0xff]
        %v394 = vld [vmem:[%s385] sm:$0x1]
        %v395 = vld [vmem:[%s385 + $0x1] sm:$0x1]
        %v396 = vld [vmem:[%s385 + $0x2] sm:$0x1]
        %v397 = vld [vmem:[%s385 + $0x3] sm:$0x1]
        %v398 = vld [vmem:[%s385 + $0x4] sm:$0x1]
        %v399 = vld [vmem:[%s385 + $0x5] sm:$0x1]
        %v400 = vld [vmem:[%s385 + $0x6] sm:$0x1]
        %v401 = vld [vmem:[%s385 + $0x7] sm:$0x1]
        %v402 = vld [vmem:[%s385 + $0x8] sm:$0x1]
        %v403 = vld [vmem:[%s385 + $0x9] sm:$0x1]
        %v404 = vld [vmem:[%s385 + $0xa] sm:$0x1]
        %v405 = vld [vmem:[%s347] sm:$0xff]
        %v406 = vld [vmem:[%s347 + $0x8] sm:$0xff]
        %v407 = vld [vmem:[%s347 + $0x10] sm:$0xff]
        %v408 = vld [vmem:[%s347 + $0x18] sm:$0xff]
        %v409 = vld [vmem:[%s347 + $0x20] sm:$0xff]
        %v410 = vld [vmem:[%s347 + $0x28] sm:$0xff]
        %v411 = vld [vmem:[%s347 + $0x30] sm:$0xff]
        %v412 = vld [vmem:[%s347 + $0x38] sm:$0xff]
        %v413 = vld [vmem:[%s347 + $0x40] sm:$0xff]
        %v414 = vld [vmem:[%s347 + $0x48] sm:$0xff]
        %v415 = vld [vmem:[%s347 + $0x50] sm:$0xff]
        %v416 = vld [vmem:[%s347 + $0x58] sm:$0xff]
        %v417 = vld [vmem:[%s347 + $0x60] sm:$0xff]
        %v418 = vld [vmem:[%s347 + $0x68] sm:$0xff]
        %v419 = vld [vmem:[%s347 + $0x70] sm:$0xff]
        %v420 = vld [vmem:[%s347 + $0x78] sm:$0xff]
        %v421 = vlaneseq
        %v422 = vshrl.u32 %v421, 7
        %v423 = vsub.s32 0, %v422
        %v424 = vrot.slane %v394, %v423
        %425 = vmatprep.subr.mxu0 0.0
        %426 = vmatpush1.msra.mxu0 %v405
        %427 = vmatprep.subr.mxu0 0.0
        %428 = vmatpush1.msra.mxu0 %v406
        %429 = vmatprep.subr.mxu0 0.0
        %430 = vmatpush1.msra.mxu0 %v407
        %431 = vmatprep.subr.mxu0 0.0
        %432 = vmatpush1.msra.mxu0 %v408
        %433 = vmatprep.subr.mxu0 0.0
        %434 = vmatpush1.msra.mxu0 %v409
        %435 = vmatprep.subr.mxu0 0.0
        %436 = vmatpush1.msra.mxu0 %v410
        %437 = vmatprep.subr.mxu0 0.0
        %438 = vmatpush1.msra.mxu0 %v411
        %439 = vmatprep.subr.mxu0 0.0
        %440 = vmatpush1.msra.mxu0 %v412
        %441 = vmatprep.subr.mxu0 0.0
        %442 = vmatpush1.msra.mxu0 %v413
        %443 = vmatprep.subr.mxu0 0.0
        %444 = vmatpush1.msra.mxu0 %v414
        %445 = vmatprep.subr.mxu0 0.0
        %446 = vmatpush1.msra.mxu0 %v415
        %447 = vmatprep.subr.mxu0 0.0
        %448 = vmatpush1.msra.mxu0 %v416
        %449 = vmatprep.subr.mxu0 0.0
        %450 = vmatpush1.msra.mxu0 %v417
        %451 = vmatprep.subr.mxu0 0.0
        %452 = vmatpush1.msra.mxu0 %v418
        %453 = vmatprep.subr.mxu0 0.0
        %454 = vmatpush1.msra.mxu0 %v419
        %455 = vmatprep.subr.mxu0 0.0
        %456 = vmatpush1.msra.mxu0 %v420
        %457 = vmatprep.subr.mxu0 0.0
        %458 = vmatpush1.msra.mxu0 0.0
        %459 = vmatprep.subr.mxu0 0.0
        %460 = vmatpush1.msra.mxu0 0.0
        %461 = vmatprep.subr.mxu0 0.0
        %462 = vmatpush1.msra.mxu0 0.0
        %463 = vmatprep.subr.mxu0 0.0
        %464 = vmatpush1.msra.mxu0 0.0
        %465 = vmatprep.subr.mxu0 0.0
        %466 = vmatpush1.msra.mxu0 0.0
        %467 = vmatprep.subr.mxu0 0.0
        %468 = vmatpush1.msra.mxu0 0.0
        %469 = vmatprep.subr.mxu0 0.0
        %470 = vmatpush1.msra.mxu0 0.0
        %471 = vmatprep.subr.mxu0 0.0
        %472 = vmatpush1.msra.mxu0 0.0
        %473 = vmatprep.subr.mxu0 0.0
        %474 = vmatpush1.msra.mxu0 0.0
        %475 = vmatprep.subr.mxu0 0.0
        %476 = vmatpush1.msra.mxu0 0.0
        %477 = vmatprep.subr.mxu0 0.0
        %478 = vmatpush1.msra.mxu0 0.0
        %479 = vmatprep.subr.mxu0 0.0
        %480 = vmatpush1.msra.mxu0 0.0
        %481 = vmatprep.subr.mxu0 0.0
        %482 = vmatpush1.msra.mxu0 0.0
        %483 = vmatprep.subr.mxu0 0.0
        %484 = vmatpush1.msra.mxu0 0.0
        %485 = vmatprep.subr.mxu0 0.0
        %486 = vmatpush1.msra.mxu0 0.0
        %487 = vmatprep.subr.mxu0 0.0
        %488 = vmatpush1.msra.mxu0 0.0
        %489 = vmatprep.mubr.f32.mxu0 0.0
        %490 = vmatmul.mubr.f32.gmra.mrb[0].mxu0 %v392
        %v491 = vpop.f32.mrb[0].mxu0
        %v492 = vadd.f32 %v424, %v491
        %v493 = vpop.f32.mrb[0].mxu0
        %494 = vdwg.mxu0
        %495 = vadd.xlane.f32.xlu0 %v492
        %v496 = vpop.xlane.xlu0 %495
        %v497 = vmul.f32 %v496, 0.03125
        %v498 = vmul.f32 %v492, %v492
        %499 = vadd.xlane.f32.xlu0 %v498
        %v500 = vpop.xlane.xlu0 %499
        %v501 = vmul.f32 %v500, 0.03125
        %v502 = vmul.f32 %v497, %v497
        %v503 = vsub.f32 %v501, %v502
        %v504 = vsub.f32 %v492, %v497
        %v505 = vadd.f32 %v503, 1e-05
        %v506 = vrsqrt.pop %v505
        %v507 = vmul.f32 %v504, %v506
        %v508 = vlaneseq
        %v509 = vshrl.u32 %v508, 7
        %v510 = vsub.s32 0, %v509
        %v511 = vrot.slane %v395, %v510
        %v512 = vmul.f32 %v507, %v511
        %v513 = vlaneseq
        %v514 = vshrl.u32 %v513, 7
        %v515 = vsub.s32 0, %v514
        %v516 = vrot.slane %v396, %v515
        %v517 = vadd.f32 %v512, %v516
        %518 = vadd.xlane.f32.xlu0 %v393
        %v519 = vpop.xlane.xlu0 %518
        %v520 = vmul.f32 %v519, 0.03125
        %v521 = vmul.f32 %v393, %v393
        %522 = vadd.xlane.f32.xlu0 %v521
        %v523 = vpop.xlane.xlu0 %522
        %v524 = vmul.f32 %v523, 0.03125
        %v525 = vmul.f32 %v520, %v520
        %v526 = vsub.f32 %v524, %v525
        %v527 = vsub.f32 %v393, %v520
        %v528 = vadd.f32 %v526, 1e-05
        %v529 = vrsqrt.pop %v528
        %v530 = vmul.f32 %v527, %v529
        %v531 = vlaneseq
        %v532 = vshrl.u32 %v531, 7
        %v533 = vsub.s32 0, %v532
        %v534 = vrot.slane %v397, %v533
        %v535 = vmul.f32 %v530, %v534
        %v536 = vlaneseq
        %v537 = vshrl.u32 %v536, 7
        %v538 = vsub.s32 0, %v537
        %v539 = vrot.slane %v398, %v538
        %v540 = vadd.f32 %v535, %v539
        %v541 = vld [vmem:[%s338] sm:$0xff]
        %v542 = vld [vmem:[%s338 + $0x8] sm:$0xff]
        %v543 = vld [vmem:[%s338 + $0x10] sm:$0xff]
        %v544 = vld [vmem:[%s338 + $0x30] sm:$0xff]
        %v545 = vld [vmem:[%s338 + $0x38] sm:$0xff]
        %v546 = vld [vmem:[%s338 + $0x40] sm:$0xff]
        %v547 = vld [vmem:[%s338 + $0x60] sm:$0xff]
        %v548 = vld [vmem:[%s338 + $0x68] sm:$0xff]
        %v549 = vld [vmem:[%s338 + $0x70] sm:$0xff]
        %v550 = vld [vmem:[%s338 + $0x90] sm:$0xff]
        %v551 = vld [vmem:[%s338 + $0x98] sm:$0xff]
        %v552 = vld [vmem:[%s338 + $0xa0] sm:$0xff]
        %v553 = vld [vmem:[%s338 + $0xc0] sm:$0xff]
        %v554 = vld [vmem:[%s338 + $0xc8] sm:$0xff]
        %v555 = vld [vmem:[%s338 + $0xd0] sm:$0xff]
        %v556 = vld [vmem:[%s338 + $0xf0] sm:$0xff]
        %v557 = vld [vmem:[%s338 + $0xf8] sm:$0xff]
        %v558 = vld [vmem:[%s338 + $0x100] sm:$0xff]
        %v559 = vld [vmem:[%s338 + $0x120] sm:$0xff]
        %v560 = vld [vmem:[%s338 + $0x128] sm:$0xff]
        %v561 = vld [vmem:[%s338 + $0x130] sm:$0xff]
        %v562 = vld [vmem:[%s338 + $0x150] sm:$0xff]
        %v563 = vld [vmem:[%s338 + $0x158] sm:$0xff]
        %v564 = vld [vmem:[%s338 + $0x160] sm:$0xff]
        %v565 = vld [vmem:[%s338 + $0x180] sm:$0xff]
        %v566 = vld [vmem:[%s338 + $0x188] sm:$0xff]
        %v567 = vld [vmem:[%s338 + $0x190] sm:$0xff]
        %v568 = vld [vmem:[%s338 + $0x1b0] sm:$0xff]
        %v569 = vld [vmem:[%s338 + $0x1b8] sm:$0xff]
        %v570 = vld [vmem:[%s338 + $0x1c0] sm:$0xff]
        %v571 = vld [vmem:[%s338 + $0x1e0] sm:$0xff]
        %v572 = vld [vmem:[%s338 + $0x1e8] sm:$0xff]
        %v573 = vld [vmem:[%s338 + $0x1f0] sm:$0xff]
        %v574 = vld [vmem:[%s338 + $0x210] sm:$0xff]
        %v575 = vld [vmem:[%s338 + $0x218] sm:$0xff]
        %v576 = vld [vmem:[%s338 + $0x220] sm:$0xff]
        %v577 = vld [vmem:[%s338 + $0x240] sm:$0xff]
        %v578 = vld [vmem:[%s338 + $0x248] sm:$0xff]
        %v579 = vld [vmem:[%s338 + $0x250] sm:$0xff]
        %v580 = vld [vmem:[%s338 + $0x270] sm:$0xff]
        %v581 = vld [vmem:[%s338 + $0x278] sm:$0xff]
        %v582 = vld [vmem:[%s338 + $0x280] sm:$0xff]
        %v583 = vld [vmem:[%s338 + $0x2a0] sm:$0xff]
        %v584 = vld [vmem:[%s338 + $0x2a8] sm:$0xff]
        %v585 = vld [vmem:[%s338 + $0x2b0] sm:$0xff]
        %v586 = vld [vmem:[%s338 + $0x2d0] sm:$0xff]
        %v587 = vld [vmem:[%s338 + $0x2d8] sm:$0xff]
        %v588 = vld [vmem:[%s338 + $0x2e0] sm:$0xff]
        %589 = vmatprep.subr.mxu0 %v542
        %590 = vmatpush1.msra.mxu0 %v541
        %591 = vmatprep.subr.mxu0 %v545
        %592 = vmatpush1.msra.mxu0 %v544
        %593 = vmatprep.subr.mxu0 %v548
        %594 = vmatpush1.msra.mxu0 %v547
        %595 = vmatprep.subr.mxu0 %v551
        %596 = vmatpush1.msra.mxu0 %v550
        %597 = vmatprep.subr.mxu0 %v554
        %598 = vmatpush1.msra.mxu0 %v553
        %599 = vmatprep.subr.mxu0 %v557
        %600 = vmatpush1.msra.mxu0 %v556
        %601 = vmatprep.subr.mxu0 %v560
        %602 = vmatpush1.msra.mxu0 %v559
        %603 = vmatprep.subr.mxu0 %v563
        %604 = vmatpush1.msra.mxu0 %v562
        %605 = vmatprep.subr.mxu0 %v566
        %606 = vmatpush1.msra.mxu0 %v565
        %607 = vmatprep.subr.mxu0 %v569
        %608 = vmatpush1.msra.mxu0 %v568
        %609 = vmatprep.subr.mxu0 %v572
        %610 = vmatpush1.msra.mxu0 %v571
        %611 = vmatprep.subr.mxu0 %v575
        %612 = vmatpush1.msra.mxu0 %v574
        %613 = vmatprep.subr.mxu0 %v578
        %614 = vmatpush1.msra.mxu0 %v577
        %615 = vmatprep.subr.mxu0 %v581
        %616 = vmatpush1.msra.mxu0 %v580
        %617 = vmatprep.subr.mxu0 %v584
        %618 = vmatpush1.msra.mxu0 %v583
        %619 = vmatprep.subr.mxu0 %v587
        %620 = vmatpush1.msra.mxu0 %v586
        %621 = vmatprep.subr.mxu0 0.0
        %622 = vmatpush1.msra.mxu0 0.0
        %623 = vmatprep.subr.mxu0 0.0
        %624 = vmatpush1.msra.mxu0 0.0
        %625 = vmatprep.subr.mxu0 0.0
        %626 = vmatpush1.msra.mxu0 0.0
        %627 = vmatprep.subr.mxu0 0.0
        %628 = vmatpush1.msra.mxu0 0.0
        %629 = vmatprep.subr.mxu0 0.0
        %630 = vmatpush1.msra.mxu0 0.0
        %631 = vmatprep.subr.mxu0 0.0
        %632 = vmatpush1.msra.mxu0 0.0
        %633 = vmatprep.subr.mxu0 0.0
        %634 = vmatpush1.msra.mxu0 0.0
        %635 = vmatprep.subr.mxu0 0.0
        %636 = vmatpush1.msra.mxu0 0.0
        %637 = vmatprep.subr.mxu0 0.0
        %638 = vmatpush1.msra.mxu0 0.0
        %639 = vmatprep.subr.mxu0 0.0
        %640 = vmatpush1.msra.mxu0 0.0
        %641 = vmatprep.subr.mxu0 0.0
        %642 = vmatpush1.msra.mxu0 0.0
        %643 = vmatprep.subr.mxu0 0.0
        %644 = vmatpush1.msra.mxu0 0.0
        %645 = vmatprep.subr.mxu0 0.0
        %646 = vmatpush1.msra.mxu0 0.0
        %647 = vmatprep.subr.mxu0 0.0
        %648 = vmatpush1.msra.mxu0 0.0
        %649 = vmatprep.subr.mxu0 0.0
        %650 = vmatpush1.msra.mxu0 0.0
        %651 = vmatprep.subr.mxu0 0.0
        %652 = vmatpush1.msra.mxu0 0.0
        %653 = vmatprep.mubr.f32.mxu0 0.0
        %654 = vmatmul.mubr.f32.gmra.mrb[0].mxu0 %v517
        %v655 = vpop.f32.mrb[0].mxu0
        %v656 = vadd.f32 0.0, %v655
        %v657 = vpop.f32.mrb[0].mxu0
        %v658 = vadd.f32 0.0, %v657
        %659 = vdwg.mxu0
        %660 = vmatprep.subr.mxu0 0.0
        %661 = vmatpush1.msra.mxu0 %v543
        %662 = vmatprep.subr.mxu0 0.0
        %663 = vmatpush1.msra.mxu0 %v546
        %664 = vmatprep.subr.mxu0 0.0
        %665 = vmatpush1.msra.mxu0 %v549
        %666 = vmatprep.subr.mxu0 0.0
        %667 = vmatpush1.msra.mxu0 %v552
        %668 = vmatprep.subr.mxu0 0.0
        %669 = vmatpush1.msra.mxu0 %v555
        %670 = vmatprep.subr.mxu0 0.0
        %671 = vmatpush1.msra.mxu0 %v558
        %672 = vmatprep.subr.mxu0 0.0
        %673 = vmatpush1.msra.mxu0 %v561
        %674 = vmatprep.subr.mxu0 0.0
        %675 = vmatpush1.msra.mxu0 %v564
        %676 = vmatprep.subr.mxu0 0.0
        %677 = vmatpush1.msra.mxu0 %v567
        %678 = vmatprep.subr.mxu0 0.0
        %679 = vmatpush1.msra.mxu0 %v570
        %680 = vmatprep.subr.mxu0 0.0
        %681 = vmatpush1.msra.mxu0 %v573
        %682 = vmatprep.subr.mxu0 0.0
        %683 = vmatpush1.msra.mxu0 %v576
        %684 = vmatprep.subr.mxu0 0.0
        %685 = vmatpush1.msra.mxu0 %v579
        %686 = vmatprep.subr.mxu0 0.0
        %687 = vmatpush1.msra.mxu0 %v582
        %688 = vmatprep.subr.mxu0 0.0
        %689 = vmatpush1.msra.mxu0 %v585
        %690 = vmatprep.subr.mxu0 0.0
        %691 = vmatpush1.msra.mxu0 %v588
        %692 = vmatprep.subr.mxu0 0.0
        %693 = vmatpush1.msra.mxu0 0.0
        %694 = vmatprep.subr.mxu0 0.0
        %695 = vmatpush1.msra.mxu0 0.0
        %696 = vmatprep.subr.mxu0 0.0
        %697 = vmatpush1.msra.mxu0 0.0
        %698 = vmatprep.subr.mxu0 0.0
        %699 = vmatpush1.msra.mxu0 0.0
        %700 = vmatprep.subr.mxu0 0.0
        %701 = vmatpush1.msra.mxu0 0.0
        %702 = vmatprep.subr.mxu0 0.0
        %703 = vmatpush1.msra.mxu0 0.0
        %704 = vmatprep.subr.mxu0 0.0
        %705 = vmatpush1.msra.mxu0 0.0
        %706 = vmatprep.subr.mxu0 0.0
        %707 = vmatpush1.msra.mxu0 0.0
        %708 = vmatprep.subr.mxu0 0.0
        %709 = vmatpush1.msra.mxu0 0.0
        %710 = vmatprep.subr.mxu0 0.0
        %711 = vmatpush1.msra.mxu0 0.0
        %712 = vmatprep.subr.mxu0 0.0
        %713 = vmatpush1.msra.mxu0 0.0
        %714 = vmatprep.subr.mxu0 0.0
        %715 = vmatpush1.msra.mxu0 0.0
        %716 = vmatprep.subr.mxu0 0.0
        %717 = vmatpush1.msra.mxu0 0.0
        %718 = vmatprep.subr.mxu0 0.0
        %719 = vmatpush1.msra.mxu0 0.0
        %720 = vmatprep.subr.mxu0 0.0
        %721 = vmatpush1.msra.mxu0 0.0
        %722 = vmatprep.subr.mxu0 0.0
        %723 = vmatpush1.msra.mxu0 0.0
        %724 = vmatprep.mubr.f32.mxu0 0.0
        %725 = vmatmul.mubr.f32.gmra.mrb[0].mxu0 %v517
        %v726 = vpop.f32.mrb[0].mxu0
        %v727 = vadd.f32 0.0, %v726
        %v728 = vpop.f32.mrb[0].mxu0
        %729 = vdwg.mxu0
        %730 = vmatprep.subr.mxu0 %v543
        %731 = vmatpush1.msra.mxu0 %v542
        %732 = vmatprep.subr.mxu0 %v546
        %733 = vmatpush1.msra.mxu0 %v545
        %734 = vmatprep.subr.mxu0 %v549
        %735 = vmatpush1.msra.mxu0 %v548
        %736 = vmatprep.subr.mxu0 %v552
        %737 = vmatpush1.msra.mxu0 %v551
        %738 = vmatprep.subr.mxu0 %v555
        %739 = vmatpush1.msra.mxu0 %v554
        %740 = vmatprep.subr.mxu0 %v558
        %741 = vmatpush1.msra.mxu0 %v557
        %742 = vmatprep.subr.mxu0 %v561
        %743 = vmatpush1.msra.mxu0 %v560
        %744 = vmatprep.subr.mxu0 %v564
        %745 = vmatpush1.msra.mxu0 %v563
        %746 = vmatprep.subr.mxu0 %v567
        %747 = vmatpush1.msra.mxu0 %v566
        %748 = vmatprep.subr.mxu0 %v570
        %749 = vmatpush1.msra.mxu0 %v569
        %750 = vmatprep.subr.mxu0 %v573
        %751 = vmatpush1.msra.mxu0 %v572
        %752 = vmatprep.subr.mxu0 %v576
        %753 = vmatpush1.msra.mxu0 %v575
        %754 = vmatprep.subr.mxu0 %v579
        %755 = vmatpush1.msra.mxu0 %v578
        %756 = vmatprep.subr.mxu0 %v582
        %757 = vmatpush1.msra.mxu0 %v581
        %758 = vmatprep.subr.mxu0 %v585
        %759 = vmatpush1.msra.mxu0 %v584
        %760 = vmatprep.subr.mxu0 %v588
        %761 = vmatpush1.msra.mxu0 %v587
        %762 = vmatprep.subr.mxu0 0.0
        %763 = vmatpush1.msra.mxu0 0.0
        %764 = vmatprep.subr.mxu0 0.0
        %765 = vmatpush1.msra.mxu0 0.0
        %766 = vmatprep.subr.mxu0 0.0
        %767 = vmatpush1.msra.mxu0 0.0
        %768 = vmatprep.subr.mxu0 0.0
        %769 = vmatpush1.msra.mxu0 0.0
        %770 = vmatprep.subr.mxu0 0.0
        %771 = vmatpush1.msra.mxu0 0.0
        %772 = vmatprep.subr.mxu0 0.0
        %773 = vmatpush1.msra.mxu0 0.0
        %774 = vmatprep.subr.mxu0 0.0
        %775 = vmatpush1.msra.mxu0 0.0
        %776 = vmatprep.subr.mxu0 0.0
        %777 = vmatpush1.msra.mxu0 0.0
        %778 = vmatprep.subr.mxu0 0.0
        %779 = vmatpush1.msra.mxu0 0.0
        %780 = vmatprep.subr.mxu0 0.0
        %781 = vmatpush1.msra.mxu0 0.0
        %782 = vmatprep.subr.mxu0 0.0
        %783 = vmatpush1.msra.mxu0 0.0
        %784 = vmatprep.subr.mxu0 0.0
        %785 = vmatpush1.msra.mxu0 0.0
        %786 = vmatprep.subr.mxu0 0.0
        %787 = vmatpush1.msra.mxu0 0.0
        %788 = vmatprep.subr.mxu0 0.0
        %789 = vmatpush1.msra.mxu0 0.0
        %790 = vmatprep.subr.mxu0 0.0
        %791 = vmatpush1.msra.mxu0 0.0
        %792 = vmatprep.subr.mxu0 0.0
        %793 = vmatpush1.msra.mxu0 0.0
        %794 = vmatprep.mubr.f32.mxu0 0.0
        %795 = vmatmul.mubr.f32.gmra.mrb[0].mxu0 %v540
        %v796 = vpop.f32.mrb[0].mxu0
        %v797 = vadd.f32 0.0, %v796
        %v798 = vpop.f32.mrb[0].mxu0
        %v799 = vadd.f32 0.0, %v798
        %800 = vdwg.mxu0
        %v801 = vld [vmem:[#allocation7] sm:$0xff]
        %v802 = vld [vmem:[#allocation7 + $0x8] sm:$0xff]
        %v803 = vld [vmem:[#allocation7 + $0x10] sm:$0xff]
        %v804 = vld [vmem:[#allocation7 + $0x18] sm:$0xff]
        %v805 = vld [vmem:[#allocation7 + $0x20] sm:$0xff]
        %v806 = vld [vmem:[#allocation7 + $0x28] sm:$0xff]
        %v807 = vld [vmem:[#allocation7 + $0x30] sm:$0xff]
        %v808 = vld [vmem:[#allocation7 + $0x38] sm:$0xff]
        %v809 = vld [vmem:[#allocation7 + $0x40] sm:$0xff]
        %v810 = vld [vmem:[#allocation7 + $0x48] sm:$0xff]
        %v811 = vld [vmem:[#allocation7 + $0x50] sm:$0xff]
        %v812 = vld [vmem:[#allocation7 + $0x58] sm:$0xff]
        %v813 = vld [vmem:[#allocation7 + $0x60] sm:$0xff]
        %v814 = vld [vmem:[#allocation7 + $0x68] sm:$0xff]
        %v815 = vld [vmem:[#allocation7 + $0x70] sm:$0xff]
        %v816 = vld [vmem:[#allocation7 + $0x78] sm:$0xff]
        %v817 = vmul.f32 %v656, %v658
        %818 = vmatprep.subr.mxu0 0.0
        %819 = vmatpush1.msra.mxu0 %v801
        %820 = vmatprep.subr.mxu0 0.0
        %821 = vmatpush1.msra.mxu0 %v802
        %822 = vmatprep.subr.mxu0 0.0
        %823 = vmatpush1.msra.mxu0 %v803
        %824 = vmatprep.subr.mxu0 0.0
        %825 = vmatpush1.msra.mxu0 %v804
        %826 = vmatprep.subr.mxu0 0.0
        %827 = vmatpush1.msra.mxu0 %v805
        %828 = vmatprep.subr.mxu0 0.0
        %829 = vmatpush1.msra.mxu0 %v806
        %830 = vmatprep.subr.mxu0 0.0
        %831 = vmatpush1.msra.mxu0 %v807
        %832 = vmatprep.subr.mxu0 0.0
        %833 = vmatpush1.msra.mxu0 %v808
        %834 = vmatprep.subr.mxu0 0.0
        %835 = vmatpush1.msra.mxu0 %v809
        %836 = vmatprep.subr.mxu0 0.0
        %837 = vmatpush1.msra.mxu0 %v810
        %838 = vmatprep.subr.mxu0 0.0
        %839 = vmatpush1.msra.mxu0 %v811
        %840 = vmatprep.subr.mxu0 0.0
        %841 = vmatpush1.msra.mxu0 %v812
        %842 = vmatprep.subr.mxu0 0.0
        %843 = vmatpush1.msra.mxu0 %v813
        %844 = vmatprep.subr.mxu0 0.0
        %845 = vmatpush1.msra.mxu0 %v814
        %846 = vmatprep.subr.mxu0 0.0
        %847 = vmatpush1.msra.mxu0 %v815
        %848 = vmatprep.subr.mxu0 0.0
        %849 = vmatpush1.msra.mxu0 %v816
        %850 = vmatprep.subr.mxu0 0.0
        %851 = vmatpush1.msra.mxu0 0.0
        %852 = vmatprep.subr.mxu0 0.0
        %853 = vmatpush1.msra.mxu0 0.0
        %854 = vmatprep.subr.mxu0 0.0
        %855 = vmatpush1.msra.mxu0 0.0
        %856 = vmatprep.subr.mxu0 0.0
        %857 = vmatpush1.msra.mxu0 0.0
        %858 = vmatprep.subr.mxu0 0.0
        %859 = vmatpush1.msra.mxu0 0.0
        %860 = vmatprep.subr.mxu0 0.0
        %861 = vmatpush1.msra.mxu0 0.0
        %862 = vmatprep.subr.mxu0 0.0
        %863 = vmatpush1.msra.mxu0 0.0
        %864 = vmatprep.subr.mxu0 0.0
        %865 = vmatpush1.msra.mxu0 0.0
        %866 = vmatprep.subr.mxu0 0.0
        %867 = vmatpush1.msra.mxu0 0.0
        %868 = vmatprep.subr.mxu0 0.0
        %869 = vmatpush1.msra.mxu0 0.0
        %870 = vmatprep.subr.mxu0 0.0
        %871 = vmatpush1.msra.mxu0 0.0
        %872 = vmatprep.subr.mxu0 0.0
        %873 = vmatpush1.msra.mxu0 0.0
        %874 = vmatprep.subr.mxu0 0.0
        %875 = vmatpush1.msra.mxu0 0.0
        %876 = vmatprep.subr.mxu0 0.0
        %877 = vmatpush1.msra.mxu0 0.0
        %878 = vmatprep.subr.mxu0 0.0
        %879 = vmatpush1.msra.mxu0 0.0
        %880 = vmatprep.subr.mxu0 0.0
        %881 = vmatpush1.msra.mxu0 0.0
        %882 = vmatprep.mubr.f32.mxu0 0.0
        %883 = vmatmul.mubr.f32.gmra.mrb[0].mxu0 %v817
        %v884 = vpop.f32.mrb[0].mxu0
        %v885 = vadd.f32 0.0, %v884
        %v886 = vpop.f32.mrb[0].mxu0
        %887 = vdwg.mxu0
        %v888 = vmul.f32 %v656, %v797
        %889 = vmatprep.subr.mxu0 0.0
        %890 = vmatpush1.msra.mxu0 %v801
        %891 = vmatprep.subr.mxu0 0.0
        %892 = vmatpush1.msra.mxu0 %v802
        %893 = vmatprep.subr.mxu0 0.0
        %894 = vmatpush1.msra.mxu0 %v803
        %895 = vmatprep.subr.mxu0 0.0
        %896 = vmatpush1.msra.mxu0 %v804
        %897 = vmatprep.subr.mxu0 0.0
        %898 = vmatpush1.msra.mxu0 %v805
        %899 = vmatprep.subr.mxu0 0.0
        %900 = vmatpush1.msra.mxu0 %v806
        %901 = vmatprep.subr.mxu0 0.0
        %902 = vmatpush1.msra.mxu0 %v807
        %903 = vmatprep.subr.mxu0 0.0
        %904 = vmatpush1.msra.mxu0 %v808
        %905 = vmatprep.subr.mxu0 0.0
        %906 = vmatpush1.msra.mxu0 %v809
        %907 = vmatprep.subr.mxu0 0.0
        %908 = vmatpush1.msra.mxu0 %v810
        %909 = vmatprep.subr.mxu0 0.0
        %910 = vmatpush1.msra.mxu0 %v811
        %911 = vmatprep.subr.mxu0 0.0
        %912 = vmatpush1.msra.mxu0 %v812
        %913 = vmatprep.subr.mxu0 0.0
        %914 = vmatpush1.msra.mxu0 %v813
        %915 = vmatprep.subr.mxu0 0.0
        %916 = vmatpush1.msra.mxu0 %v814
        %917 = vmatprep.subr.mxu0 0.0
        %918 = vmatpush1.msra.mxu0 %v815
        %919 = vmatprep.subr.mxu0 0.0
        %920 = vmatpush1.msra.mxu0 %v816
        %921 = vmatprep.subr.mxu0 0.0
        %922 = vmatpush1.msra.mxu0 0.0
        %923 = vmatprep.subr.mxu0 0.0
        %924 = vmatpush1.msra.mxu0 0.0
        %925 = vmatprep.subr.mxu0 0.0
        %926 = vmatpush1.msra.mxu0 0.0
        %927 = vmatprep.subr.mxu0 0.0
        %928 = vmatpush1.msra.mxu0 0.0
        %929 = vmatprep.subr.mxu0 0.0
        %930 = vmatpush1.msra.mxu0 0.0
        %931 = vmatprep.subr.mxu0 0.0
        %932 = vmatpush1.msra.mxu0 0.0
        %933 = vmatprep.subr.mxu0 0.0
        %934 = vmatpush1.msra.mxu0 0.0
        %935 = vmatprep.subr.mxu0 0.0
        %936 = vmatpush1.msra.mxu0 0.0
        %937 = vmatprep.subr.mxu0 0.0
        %938 = vmatpush1.msra.mxu0 0.0
        %939 = vmatprep.subr.mxu0 0.0
        %940 = vmatpush1.msra.mxu0 0.0
        %941 = vmatprep.subr.mxu0 0.0
        %942 = vmatpush1.msra.mxu0 0.0
        %943 = vmatprep.subr.mxu0 0.0
        %944 = vmatpush1.msra.mxu0 0.0
        %945 = vmatprep.subr.mxu0 0.0
        %946 = vmatpush1.msra.mxu0 0.0
        %947 = vmatprep.subr.mxu0 0.0
        %948 = vmatpush1.msra.mxu0 0.0
        %949 = vmatprep.subr.mxu0 0.0
        %950 = vmatpush1.msra.mxu0 0.0
        %951 = vmatprep.subr.mxu0 0.0
        %952 = vmatpush1.msra.mxu0 0.0
        %953 = vmatprep.mubr.f32.mxu0 0.0
        %954 = vmatmul.mubr.f32.gmra.mrb[0].mxu0 %v888
        %v955 = vpop.f32.mrb[0].mxu0
        %v956 = vadd.f32 0.0, %v955
        %v957 = vpop.f32.mrb[0].mxu0
        %958 = vdwg.mxu0
        %v959 = vmax.f32 %v885, %v956
        %v960 = vsub.f32 %v885, %v959
        %v961 = vmul.f32 %v960, 1.442695
        %v962 = vpow.pop %v961
        %v963 = vsub.f32 %v956, %v959
        %v964 = vmul.f32 %v963, 1.442695
        %v965 = vpow.pop %v964
        %v966 = vadd.f32 %v962, %v965
        %v967 = vrcp.pop %v966
        %v968 = vmul.f32 %v962, %v967
        %v969 = vmul.f32 %v968, %v727
        %v970 = vmul.f32 %v965, %v967
        %v971 = vmul.f32 %v970, %v799
        %v972 = vadd.f32 %v969, %v971
        %v973 = vadd.f32 %v972, %v517
        %v974 = vld [vmem:[%s338 + $0x18] sm:$0xff]
        %v975 = vld [vmem:[%s338 + $0x48] sm:$0xff]
        %v976 = vld [vmem:[%s338 + $0x78] sm:$0xff]
        %v977 = vld [vmem:[%s338 + $0xa8] sm:$0xff]
        %v978 = vld [vmem:[%s338 + $0xd8] sm:$0xff]
        %v979 = vld [vmem:[%s338 + $0x108] sm:$0xff]
        %v980 = vld [vmem:[%s338 + $0x138] sm:$0xff]
        %v981 = vld [vmem:[%s338 + $0x168] sm:$0xff]
        %v982 = vld [vmem:[%s338 + $0x198] sm:$0xff]
        %v983 = vld [vmem:[%s338 + $0x1c8] sm:$0xff]
        %v984 = vld [vmem:[%s338 + $0x1f8] sm:$0xff]
        %v985 = vld [vmem:[%s338 + $0x228] sm:$0xff]
        %v986 = vld [vmem:[%s338 + $0x258] sm:$0xff]
        %v987 = vld [vmem:[%s338 + $0x288] sm:$0xff]
        %v988 = vld [vmem:[%s338 + $0x2b8] sm:$0xff]
        %v989 = vld [vmem:[%s338 + $0x2e8] sm:$0xff]
        %v990 = vlaneseq
        %v991 = vshrl.u32 %v990, 7
        %v992 = vsub.s32 0, %v991
        %v993 = vrot.slane %v399, %v992
        %994 = vmatprep.subr.mxu0 0.0
        %995 = vmatpush1.msra.mxu0 %v974
        %996 = vmatprep.subr.mxu0 0.0
        %997 = vmatpush1.msra.mxu0 %v975
        %998 = vmatprep.subr.mxu0 0.0
        %999 = vmatpush1.msra.mxu0 %v976
        %1000 = vmatprep.subr.mxu0 0.0
        %1001 = vmatpush1.msra.mxu0 %v977
        %1002 = vmatprep.subr.mxu0 0.0
        %1003 = vmatpush1.msra.mxu0 %v978
        %1004 = vmatprep.subr.mxu0 0.0
        %1005 = vmatpush1.msra.mxu0 %v979
        %1006 = vmatprep.subr.mxu0 0.0
        %1007 = vmatpush1.msra.mxu0 %v980
        %1008 = vmatprep.subr.mxu0 0.0
        %1009 = vmatpush1.msra.mxu0 %v981
        %1010 = vmatprep.subr.mxu0 0.0
        %1011 = vmatpush1.msra.mxu0 %v982
        %1012 = vmatprep.subr.mxu0 0.0
        %1013 = vmatpush1.msra.mxu0 %v983
        %1014 = vmatprep.subr.mxu0 0.0
        %1015 = vmatpush1.msra.mxu0 %v984
        %1016 = vmatprep.subr.mxu0 0.0
        %1017 = vmatpush1.msra.mxu0 %v985
        %1018 = vmatprep.subr.mxu0 0.0
        %1019 = vmatpush1.msra.mxu0 %v986
        %1020 = vmatprep.subr.mxu0 0.0
        %1021 = vmatpush1.msra.mxu0 %v987
        %1022 = vmatprep.subr.mxu0 0.0
        %1023 = vmatpush1.msra.mxu0 %v988
        %1024 = vmatprep.subr.mxu0 0.0
        %1025 = vmatpush1.msra.mxu0 %v989
        %1026 = vmatprep.subr.mxu0 0.0
        %1027 = vmatpush1.msra.mxu0 0.0
        %1028 = vmatprep.subr.mxu0 0.0
        %1029 = vmatpush1.msra.mxu0 0.0
        %1030 = vmatprep.subr.mxu0 0.0
        %1031 = vmatpush1.msra.mxu0 0.0
        %1032 = vmatprep.subr.mxu0 0.0
        %1033 = vmatpush1.msra.mxu0 0.0
        %1034 = vmatprep.subr.mxu0 0.0
        %1035 = vmatpush1.msra.mxu0 0.0
        %1036 = vmatprep.subr.mxu0 0.0
        %1037 = vmatpush1.msra.mxu0 0.0
        %1038 = vmatprep.subr.mxu0 0.0
        %1039 = vmatpush1.msra.mxu0 0.0
        %1040 = vmatprep.subr.mxu0 0.0
        %1041 = vmatpush1.msra.mxu0 0.0
        %1042 = vmatprep.subr.mxu0 0.0
        %1043 = vmatpush1.msra.mxu0 0.0
        %1044 = vmatprep.subr.mxu0 0.0
        %1045 = vmatpush1.msra.mxu0 0.0
        %1046 = vmatprep.subr.mxu0 0.0
        %1047 = vmatpush1.msra.mxu0 0.0
        %1048 = vmatprep.subr.mxu0 0.0
        %1049 = vmatpush1.msra.mxu0 0.0
        %1050 = vmatprep.subr.mxu0 0.0
        %1051 = vmatpush1.msra.mxu0 0.0
        %1052 = vmatprep.subr.mxu0 0.0
        %1053 = vmatpush1.msra.mxu0 0.0
        %1054 = vmatprep.subr.mxu0 0.0
        %1055 = vmatpush1.msra.mxu0 0.0
        %1056 = vmatprep.subr.mxu0 0.0
        %1057 = vmatpush1.msra.mxu0 0.0
        %1058 = vmatprep.mubr.f32.mxu0 0.0
        %1059 = vmatmul.mubr.f32.gmra.mrb[0].mxu0 %v973
        %v1060 = vpop.f32.mrb[0].mxu0
        %v1061 = vadd.f32 %v993, %v1060
        %v1062 = vpop.f32.mrb[0].mxu0
        %1063 = vdwg.mxu0
        %v1064 = vadd.f32 %v517, %v1061
        %1065 = vadd.xlane.f32.xlu0 %v1064
        %v1066 = vpop.xlane.xlu0 %1065
        %v1067 = vmul.f32 %v1066, 0.03125
        %v1068 = vmul.f32 %v1064, %v1064
        %1069 = vadd.xlane.f32.xlu0 %v1068
        %v1070 = vpop.xlane.xlu0 %1069
        %v1071 = vmul.f32 %v1070, 0.03125
        %v1072 = vmul.f32 %v1067, %v1067
        %v1073 = vsub.f32 %v1071, %v1072
        %v1074 = vsub.f32 %v1064, %v1067
        %v1075 = vadd.f32 %v1073, 1e-05
        %v1076 = vrsqrt.pop %v1075
        %v1077 = vmul.f32 %v1074, %v1076
        %v1078 = vlaneseq
        %v1079 = vshrl.u32 %v1078, 7
        %v1080 = vsub.s32 0, %v1079
        %v1081 = vrot.slane %v400, %v1080
        %v1082 = vmul.f32 %v1077, %v1081
        %v1083 = vlaneseq
        %v1084 = vshrl.u32 %v1083, 7
        %v1085 = vsub.s32 0, %v1084
        %v1086 = vrot.slane %v401, %v1085
        %v1087 = vadd.f32 %v1082, %v1086
        %v1088 = vld [vmem:[%s338 + $0x20] sm:$0xff]
        %v1089 = vld [vmem:[%s338 + $0x50] sm:$0xff]
        %v1090 = vld [vmem:[%s338 + $0x80] sm:$0xff]
        %v1091 = vld [vmem:[%s338 + $0xb0] sm:$0xff]
        %v1092 = vld [vmem:[%s338 + $0xe0] sm:$0xff]
        %v1093 = vld [vmem:[%s338 + $0x110] sm:$0xff]
        %v1094 = vld [vmem:[%s338 + $0x140] sm:$0xff]
        %v1095 = vld [vmem:[%s338 + $0x170] sm:$0xff]
        %v1096 = vld [vmem:[%s338 + $0x1a0] sm:$0xff]
        %v1097 = vld [vmem:[%s338 + $0x1d0] sm:$0xff]
        %v1098 = vld [vmem:[%s338 + $0x200] sm:$0xff]
        %v1099 = vld [vmem:[%s338 + $0x230] sm:$0xff]
        %v1100 = vld [vmem:[%s338 + $0x260] sm:$0xff]
        %v1101 = vld [vmem:[%s338 + $0x290] sm:$0xff]
        %v1102 = vld [vmem:[%s338 + $0x2c0] sm:$0xff]
        %v1103 = vld [vmem:[%s338 + $0x2f0] sm:$0xff]
        %v1104 = vlaneseq
        %v1105 = vshrl.u32 %v1104, 7
        %v1106 = vsub.s32 0, %v1105
        %v1107 = vrot.slane %v402, %v1106
        %1108 = vmatprep.subr.mxu0 0.0
        %1109 = vmatpush1.msra.mxu0 %v1088
        %1110 = vmatprep.subr.mxu0 0.0
        %1111 = vmatpush1.msra.mxu0 %v1089
        %1112 = vmatprep.subr.mxu0 0.0
        %1113 = vmatpush1.msra.mxu0 %v1090
        %1114 = vmatprep.subr.mxu0 0.0
        %1115 = vmatpush1.msra.mxu0 %v1091
        %1116 = vmatprep.subr.mxu0 0.0
        %1117 = vmatpush1.msra.mxu0 %v1092
        %1118 = vmatprep.subr.mxu0 0.0
        %1119 = vmatpush1.msra.mxu0 %v1093
        %1120 = vmatprep.subr.mxu0 0.0
        %1121 = vmatpush1.msra.mxu0 %v1094
        %1122 = vmatprep.subr.mxu0 0.0
        %1123 = vmatpush1.msra.mxu0 %v1095
        %1124 = vmatprep.subr.mxu0 0.0
        %1125 = vmatpush1.msra.mxu0 %v1096
        %1126 = vmatprep.subr.mxu0 0.0
        %1127 = vmatpush1.msra.mxu0 %v1097
        %1128 = vmatprep.subr.mxu0 0.0
        %1129 = vmatpush1.msra.mxu0 %v1098
        %1130 = vmatprep.subr.mxu0 0.0
        %1131 = vmatpush1.msra.mxu0 %v1099
        %1132 = vmatprep.subr.mxu0 0.0
        %1133 = vmatpush1.msra.mxu0 %v1100
        %1134 = vmatprep.subr.mxu0 0.0
        %1135 = vmatpush1.msra.mxu0 %v1101
        %1136 = vmatprep.subr.mxu0 0.0
        %1137 = vmatpush1.msra.mxu0 %v1102
        %1138 = vmatprep.subr.mxu0 0.0
        %1139 = vmatpush1.msra.mxu0 %v1103
        %1140 = vmatprep.subr.mxu0 0.0
        %1141 = vmatpush1.msra.mxu0 0.0
        %1142 = vmatprep.subr.mxu0 0.0
        %1143 = vmatpush1.msra.mxu0 0.0
        %1144 = vmatprep.subr.mxu0 0.0
        %1145 = vmatpush1.msra.mxu0 0.0
        %1146 = vmatprep.subr.mxu0 0.0
        %1147 = vmatpush1.msra.mxu0 0.0
        %1148 = vmatprep.subr.mxu0 0.0
        %1149 = vmatpush1.msra.mxu0 0.0
        %1150 = vmatprep.subr.mxu0 0.0
        %1151 = vmatpush1.msra.mxu0 0.0
        %1152 = vmatprep.subr.mxu0 0.0
        %1153 = vmatpush1.msra.mxu0 0.0
        %1154 = vmatprep.subr.mxu0 0.0
        %1155 = vmatpush1.msra.mxu0 0.0
        %1156 = vmatprep.subr.mxu0 0.0
        %1157 = vmatpush1.msra.mxu0 0.0
        %1158 = vmatprep.subr.mxu0 0.0
        %1159 = vmatpush1.msra.mxu0 0.0
        %1160 = vmatprep.subr.mxu0 0.0
        %1161 = vmatpush1.msra.mxu0 0.0
        %1162 = vmatprep.subr.mxu0 0.0
        %1163 = vmatpush1.msra.mxu0 0.0
        %1164 = vmatprep.subr.mxu0 0.0
        %1165 = vmatpush1.msra.mxu0 0.0
        %1166 = vmatprep.subr.mxu0 0.0
        %1167 = vmatpush1.msra.mxu0 0.0
        %1168 = vmatprep.subr.mxu0 0.0
        %1169 = vmatpush1.msra.mxu0 0.0
        %1170 = vmatprep.subr.mxu0 0.0
        %1171 = vmatpush1.msra.mxu0 0.0
        %1172 = vmatprep.mubr.f32.mxu0 0.0
        %1173 = vmatmul.mubr.f32.gmra.mrb[0].mxu0 %v1087
        %v1174 = vpop.f32.mrb[0].mxu0
        %v1175 = vadd.f32 %v1107, %v1174
        %v1176 = vpop.f32.mrb[0].mxu0
        %1177 = vdwg.mxu0
        %v1178 = vmul.f32 %v1175, 0.5
        %v1179 = vmul.f32 %v1175, 0.70710677
        %vm1180 = vcmp.ge.f32.partialorder %v1179, 0.0
        %v1181 = vsel %vm1180, 1.0, -1.0
        %v1182 = vand.u32 2147483647, %v1179
        %v1183 = vmul.f32 %v1182, 0.3275911
        %v1184 = vadd.f32 %v1183, 1.0
        %v1185 = vrcp.pop %v1184
        %v1186 = vmul.f32 1.0, %v1185
        %v1187 = vmul.f32 %v1186, 1.0614054
        %v1188 = vadd.f32 %v1187, -1.4531521
        %v1189 = vmul.f32 %v1188, %v1186
        %v1190 = vadd.f32 %v1189, 1.4214138
        %v1191 = vmul.f32 %v1190, %v1186
        %v1192 = vadd.f32 %v1191, -0.28449672
        %v1193 = vmul.f32 %v1192, %v1186
        %v1194 = vadd.f32 %v1193, 0.2548296
        %v1195 = vmul.f32 %v1194, %v1186
        %v1196 = vsub.f32 0.0, %v1182
        %v1197 = vmul.f32 %v1196, %v1182
        %v1198 = vmul.f32 %v1197, 1.442695
        %v1199 = vpow.pop %v1198
        %v1200 = vmul.f32 %v1195, %v1199
        %v1201 = vsub.f32 1.0, %v1200
        %v1202 = vmul.f32 %v1181, %v1201
        %v1203 = vadd.f32 %v1202, 1.0
        %v1204 = vmul.f32 %v1178, %v1203
        %v1205 = vld [vmem:[%s347 + $0x80] sm:$0xff]
        %v1206 = vld [vmem:[%s347 + $0x88] sm:$0xff]
        %v1207 = vld [vmem:[%s347 + $0x90] sm:$0xff]
        %v1208 = vld [vmem:[%s347 + $0x98] sm:$0xff]
        %v1209 = vld [vmem:[%s347 + $0xa0] sm:$0xff]
        %v1210 = vld [vmem:[%s347 + $0xa8] sm:$0xff]
        %v1211 = vld [vmem:[%s347 + $0xb0] sm:$0xff]
        %v1212 = vld [vmem:[%s347 + $0xb8] sm:$0xff]
        %v1213 = vld [vmem:[%s347 + $0xc0] sm:$0xff]
        %v1214 = vld [vmem:[%s347 + $0xc8] sm:$0xff]
        %v1215 = vld [vmem:[%s347 + $0xd0] sm:$0xff]
        %v1216 = vld [vmem:[%s347 + $0xd8] sm:$0xff]
        %v1217 = vld [vmem:[%s347 + $0xe0] sm:$0xff]
        %v1218 = vld [vmem:[%s347 + $0xe8] sm:$0xff]
        %v1219 = vld [vmem:[%s347 + $0xf0] sm:$0xff]
        %v1220 = vld [vmem:[%s347 + $0xf8] sm:$0xff]
        %v1221 = vlaneseq
        %v1222 = vshrl.u32 %v1221, 7
        %v1223 = vsub.s32 0, %v1222
        %v1224 = vrot.slane %v403, %v1223
        %1225 = vmatprep.subr.mxu0 0.0
        %1226 = vmatpush1.msra.mxu0 %v1205
        %1227 = vmatprep.subr.mxu0 0.0
        %1228 = vmatpush1.msra.mxu0 %v1206
        %1229 = vmatprep.subr.mxu0 0.0
        %1230 = vmatpush1.msra.mxu0 %v1207
        %1231 = vmatprep.subr.mxu0 0.0
        %1232 = vmatpush1.msra.mxu0 %v1208
        %1233 = vmatprep.subr.mxu0 0.0
        %1234 = vmatpush1.msra.mxu0 %v1209
        %1235 = vmatprep.subr.mxu0 0.0
        %1236 = vmatpush1.msra.mxu0 %v1210
        %1237 = vmatprep.subr.mxu0 0.0
        %1238 = vmatpush1.msra.mxu0 %v1211
        %1239 = vmatprep.subr.mxu0 0.0
        %1240 = vmatpush1.msra.mxu0 %v1212
        %1241 = vmatprep.subr.mxu0 0.0
        %1242 = vmatpush1.msra.mxu0 %v1213
        %1243 = vmatprep.subr.mxu0 0.0
        %1244 = vmatpush1.msra.mxu0 %v1214
        %1245 = vmatprep.subr.mxu0 0.0
        %1246 = vmatpush1.msra.mxu0 %v1215
        %1247 = vmatprep.subr.mxu0 0.0
        %1248 = vmatpush1.msra.mxu0 %v1216
        %1249 = vmatprep.subr.mxu0 0.0
        %1250 = vmatpush1.msra.mxu0 %v1217
        %1251 = vmatprep.subr.mxu0 0.0
        %1252 = vmatpush1.msra.mxu0 %v1218
        %1253 = vmatprep.subr.mxu0 0.0
        %1254 = vmatpush1.msra.mxu0 %v1219
        %1255 = vmatprep.subr.mxu0 0.0
        %1256 = vmatpush1.msra.mxu0 %v1220
        %1257 = vmatprep.subr.mxu0 0.0
        %1258 = vmatpush1.msra.mxu0 0.0
        %1259 = vmatprep.subr.mxu0 0.0
        %1260 = vmatpush1.msra.mxu0 0.0
        %1261 = vmatprep.subr.mxu0 0.0
        %1262 = vmatpush1.msra.mxu0 0.0
        %1263 = vmatprep.subr.mxu0 0.0
        %1264 = vmatpush1.msra.mxu0 0.0
        %1265 = vmatprep.subr.mxu0 0.0
        %1266 = vmatpush1.msra.mxu0 0.0
        %1267 = vmatprep.subr.mxu0 0.0
        %1268 = vmatpush1.msra.mxu0 0.0
        %1269 = vmatprep.subr.mxu0 0.0
        %1270 = vmatpush1.msra.mxu0 0.0
        %1271 = vmatprep.subr.mxu0 0.0
        %1272 = vmatpush1.msra.mxu0 0.0
        %1273 = vmatprep.subr.mxu0 0.0
        %1274 = vmatpush1.msra.mxu0 0.0
        %1275 = vmatprep.subr.mxu0 0.0
        %1276 = vmatpush1.msra.mxu0 0.0
        %1277 = vmatprep.subr.mxu0 0.0
        %1278 = vmatpush1.msra.mxu0 0.0
        %1279 = vmatprep.subr.mxu0 0.0
        %1280 = vmatpush1.msra.mxu0 0.0
        %1281 = vmatprep.subr.mxu0 0.0
        %1282 = vmatpush1.msra.mxu0 0.0
        %1283 = vmatprep.subr.mxu0 0.0
        %1284 = vmatpush1.msra.mxu0 0.0
        %1285 = vmatprep.subr.mxu0 0.0
        %1286 = vmatpush1.msra.mxu0 0.0
        %1287 = vmatprep.subr.mxu0 0.0
        %1288 = vmatpush1.msra.mxu0 0.0
        %1289 = vmatprep.mubr.f32.mxu0 0.0
        %1290 = vmatmul.mubr.f32.gmra.mrb[0].mxu0 %v1204
        %v1291 = vpop.f32.mrb[0].mxu0
        %v1292 = vadd.f32 %v1224, %v1291
        %v1293 = vpop.f32.mrb[0].mxu0
        %1294 = vdwg.mxu0
        %v1295 = vadd.f32 %v1064, %v1292
        %v1296 = vld [vmem:[%s338 + $0x28] sm:$0xff]
        %v1297 = vld [vmem:[%s338 + $0x58] sm:$0xff]
        %v1298 = vld [vmem:[%s338 + $0x88] sm:$0xff]
        %v1299 = vld [vmem:[%s338 + $0xb8] sm:$0xff]
        %v1300 = vld [vmem:[%s338 + $0xe8] sm:$0xff]
        %v1301 = vld [vmem:[%s338 + $0x118] sm:$0xff]
        %v1302 = vld [vmem:[%s338 + $0x148] sm:$0xff]
        %v1303 = vld [vmem:[%s338 + $0x178] sm:$0xff]
        %v1304 = vld [vmem:[%s338 + $0x1a8] sm:$0xff]
        %v1305 = vld [vmem:[%s338 + $0x1d8] sm:$0xff]
        %v1306 = vld [vmem:[%s338 + $0x208] sm:$0xff]
        %v1307 = vld [vmem:[%s338 + $0x238] sm:$0xff]
        %v1308 = vld [vmem:[%s338 + $0x268] sm:$0xff]
        %v1309 = vld [vmem:[%s338 + $0x298] sm:$0xff]
        %v1310 = vld [vmem:[%s338 + $0x2c8] sm:$0xff]
        %v1311 = vld [vmem:[%s338 + $0x2f8] sm:$0xff]
        %v1312 = vlaneseq
        %v1313 = vshrl.u32 %v1312, 7
        %v1314 = vsub.s32 0, %v1313
        %v1315 = vrot.slane %v404, %v1314
        %1316 = vmatprep.subr.mxu0 0.0
        %1317 = vmatpush1.msra.mxu0 %v1296
        %1318 = vmatprep.subr.mxu0 0.0
        %1319 = vmatpush1.msra.mxu0 %v1297
        %1320 = vmatprep.subr.mxu0 0.0
        %1321 = vmatpush1.msra.mxu0 %v1298
        %1322 = vmatprep.subr.mxu0 0.0
        %1323 = vmatpush1.msra.mxu0 %v1299
        %1324 = vmatprep.subr.mxu0 0.0
        %1325 = vmatpush1.msra.mxu0 %v1300
        %1326 = vmatprep.subr.mxu0 0.0
        %1327 = vmatpush1.msra.mxu0 %v1301
        %1328 = vmatprep.subr.mxu0 0.0
        %1329 = vmatpush1.msra.mxu0 %v1302
        %1330 = vmatprep.subr.mxu0 0.0
        %1331 = vmatpush1.msra.mxu0 %v1303
        %1332 = vmatprep.subr.mxu0 0.0
        %1333 = vmatpush1.msra.mxu0 %v1304
        %1334 = vmatprep.subr.mxu0 0.0
        %1335 = vmatpush1.msra.mxu0 %v1305
        %1336 = vmatprep.subr.mxu0 0.0
        %1337 = vmatpush1.msra.mxu0 %v1306
        %1338 = vmatprep.subr.mxu0 0.0
        %1339 = vmatpush1.msra.mxu0 %v1307
        %1340 = vmatprep.subr.mxu0 0.0
        %1341 = vmatpush1.msra.mxu0 %v1308
        %1342 = vmatprep.subr.mxu0 0.0
        %1343 = vmatpush1.msra.mxu0 %v1309
        %1344 = vmatprep.subr.mxu0 0.0
        %1345 = vmatpush1.msra.mxu0 %v1310
        %1346 = vmatprep.subr.mxu0 0.0
        %1347 = vmatpush1.msra.mxu0 %v1311
        %1348 = vmatprep.subr.mxu0 0.0
        %1349 = vmatpush1.msra.mxu0 0.0
        %1350 = vmatprep.subr.mxu0 0.0
        %1351 = vmatpush1.msra.mxu0 0.0
        %1352 = vmatprep.subr.mxu0 0.0
        %1353 = vmatpush1.msra.mxu0 0.0
        %1354 = vmatprep.subr.mxu0 0.0
        %1355 = vmatpush1.msra.mxu0 0.0
        %1356 = vmatprep.subr.mxu0 0.0
        %1357 = vmatpush1.msra.mxu0 0.0
        %1358 = vmatprep.subr.mxu0 0.0
        %1359 = vmatpush1.msra.mxu0 0.0
        %1360 = vmatprep.subr.mxu0 0.0
        %1361 = vmatpush1.msra.mxu0 0.0
        %1362 = vmatprep.subr.mxu0 0.0
        %1363 = vmatpush1.msra.mxu0 0.0
        %1364 = vmatprep.subr.mxu0 0.0
        %1365 = vmatpush1.msra.mxu0 0.0
        %1366 = vmatprep.subr.mxu0 0.0
        %1367 = vmatpush1.msra.mxu0 0.0
        %1368 = vmatprep.subr.mxu0 0.0
        %1369 = vmatpush1.msra.mxu0 0.0
        %1370 = vmatprep.subr.mxu0 0.0
        %1371 = vmatpush1.msra.mxu0 0.0
        %1372 = vmatprep.subr.mxu0 0.0
        %1373 = vmatpush1.msra.mxu0 0.0
        %1374 = vmatprep.subr.mxu0 0.0
        %1375 = vmatpush1.msra.mxu0 0.0
        %1376 = vmatprep.subr.mxu0 0.0
        %1377 = vmatpush1.msra.mxu0 0.0
        %1378 = vmatprep.subr.mxu0 0.0
        %1379 = vmatpush1.msra.mxu0 0.0
        %1380 = vmatprep.mubr.f32.mxu0 0.0
        %1381 = vmatmul.mubr.f32.gmra.mrb[0].mxu0 %v1295
        %v1382 = vpop.f32.mrb[0].mxu0
        %v1383 = vadd.f32 %v1315, %v1382
        %v1384 = vpop.f32.mrb[0].mxu0
        %1385 = vdwg.mxu0
        %v1386 = vadd.f32 %v392, %v1383
        %1387 = vst [vmem:[#allocation11] sm:$0xff] %v1386
        // Predicated region
        $region69: #{tpu_custom_call.1} parent=43 // pred_check
          %p1388 = pneg %p204
        $region70: #{tpu_custom_call.1} parent=43 // pred_check_branch
          %1390 = sbr.rel (%p1388) target = $region72
        $region71: #{tpu_custom_call.1} parent=43 // pred_region
          %s1392 = ssub.s32 128, 128
          %1393 = vsyncadd [#allocation4], %s1392
          %s1394 = smul.addr %s27, 128
          %s1395 = scalar_lea.hbm %s6, %s1394
          %s1397 = sshll.u32 [#allocation11], 4
          %s1398 = int_to_ptr.vmem [resolvable:$true] %s1397
          %1400 = dma.vmem_to_hbm [thread:$0]  %s1398, 128, %s1395, [#allocation4]
        $region72: #{tpu_custom_call.1} parent=43 // pred_fallthru
          _
        // Predicated region
        $region73: #{tpu_custom_call.1} parent=43 // pred_check
          %p1401 = pneg %p204
        $region74: #{tpu_custom_call.1} parent=43 // pred_check_branch
          %1403 = sbr.rel (%p1401) target = $region76
        $region75: #{tpu_custom_call.1} parent=43 // pred_region
          %1404 = dma.done [#allocation4], 128
        $region76: #{tpu_custom_call.1} parent=43 // pred_fallthru
          _
      $region44: #{tpu_custom_call.1} parent=5 // pred_fallthru
        _
      %p1405 = scmp.le.s32.totalorder 2, %s18
      // Predicated region
      $region77: #{tpu_custom_call.1} parent=5 // pred_check
        %p1406 = pneg %p1405
      $region78: #{tpu_custom_call.1} parent=5 // pred_check_branch
        %1408 = sbr.rel (%p1406) target = $region80
      $region79: #{tpu_custom_call.1} parent=5 // pred_region
        %s1409 = ssub.s32 %s18, 2
      $region80: #{tpu_custom_call.1} parent=5 // pred_fallthru
        _
    $region6: #{tpu_custom_call.1} parent=1 // loop_footer
      %s22 = sadd.s32 1, %s18
    $region7: #{tpu_custom_call.1} parent=1 // loop_footer_branch
      %17 = sbr.rel target = $region3
    $region8: #{tpu_custom_call.1} parent=1 // loop_exit
      _
    %1410 = vsyncpa [#allocation3], 1
    %s1411 = scalar_lea.sflag [#allocation3], 1
    %1412 = vsyncpa %s1411, 1
    %1413 = vsyncpa [#allocation6], 1
    %1414 = vsyncpa [#allocation9], 1
    %s1415 = scalar_lea.sflag [#allocation9], 1
    %1416 = vsyncpa %s1415, 1
    %1417 = vsyncpa [#allocation4], 1
    %s1418 = scalar_lea.sflag [#allocation4], 1
    %1419 = vsyncpa %s1418, 1

</llo_original>
